<compile_context>
chip_gen: v5e
topology: v5e:2x2
jax: 0.10.0
libtpu: 0.0.40
codegen_flags: <defaults>
</compile_context>

<pallas_src>
import functools
import math

import jax
import jax.numpy as jnp
from jax import lax
from jax.experimental import pallas as pl
from jax.experimental.pallas import tpu as pltpu


def _vmem_capacity_bytes():
    try:
        return int(pltpu.get_tpu_info().vmem_capacity_bytes)
    except Exception:
        return 64 * 1024 * 1024   # conservative fallback (v7x physical per-TC)


def _tap_kernel(w_ref, b_ref, ee_ref, eo_ref, oe_ref, oo_ref, oeu_ref, oou_ref,
                o_ref, *, wo: int):
    """out_T (Cout, tm) = sum over 9 taps of w[t] @ slab_t (C, tm) + bias.

    Slabs are parity-split quadrants of x, flattened over (ho, wo).  kj=0 taps
    (left neighbour) are built in VMEM by a one-lane shift plus a wo==0 mask —
    valid because every tile starts at a wo==0 boundary (tm % Wo == 0).
    """
    ee = ee_ref[0]     # (C, tm)
    eo = eo_ref[0]
    oe = oe_ref[0]
    oo = oo_ref[0]
    oeu = oeu_ref[0]   # oe shifted down one output row (zeros at ho == 0)
    oou = oou_ref[0]   # oo shifted down one output row (zeros at ho == 0)

    tm = ee.shape[-1]
    lane = lax.broadcasted_iota(jnp.int32, (1, tm), 1)
    interior = (lane % wo) != 0          # wo == 0 columns take the zero pad

    def left(t):
        # t[:, m] -> t[:, m-1]; zero where the left neighbour is the W padding.
        shifted = jnp.concatenate([jnp.zeros_like(t[:, :1]), t[:, :-1]], axis=1)
        return jnp.where(interior, shifted, jnp.zeros_like(shifted))

    def mm(t, slab):
        return jnp.dot(w_ref[t], slab, precision=lax.Precision.HIGHEST,
                       preferred_element_type=jnp.float32)

    # tap index t = 3*ki + kj ; input pixel of tap (ki, kj) is x[2ho+ki-1, 2wo+kj-1]
    acc = mm(4, ee)               # (1,1) centre
    acc += mm(5, eo)              # (1,2)
    acc += mm(3, left(eo))        # (1,0)
    acc += mm(7, oe)              # (2,1)
    acc += mm(1, oeu)             # (0,1)
    acc += mm(8, oo)              # (2,2)
    acc += mm(6, left(oo))        # (2,0)
    acc += mm(2, oou)             # (0,2)
    acc += mm(0, left(oou))       # (0,0)

    o_ref[0] = (acc + b_ref[...]).astype(o_ref.dtype)


def downsample_with_skip(x, weight, bias, factor=2, avg_channels=2):
    """x: (N, Cin, H, W) NCHW, weight: (Cout, Cin, 3, 3), bias: (Cout,)."""
    N, C, H, W = x.shape
    Cout = weight.shape[0]

    # This kernel covers the module's default config (factor=2, pixel-unshuffle
    # skip averaged over channel pairs); other configs fall outside the fold.
    assert factor == 2 and avg_channels == 2, "kernel covers the default config"
    assert Cout == C * factor * factor // avg_channels, "conv-out vs skip channel mismatch"
    assert H % 2 == 0 and W % 2 == 0, "PixelUnshuffle(2) needs even H, W"

    Ho, Wo = H // 2, W // 2
    HoWo = Ho * Wo
    itemsize = jnp.dtype(x.dtype).itemsize

    # ---- fold the pixel-unshuffle-mean residual into the conv weights ----
    # res[n, 2c+i, ho, wo] = 0.5*(x[n,c,2ho+i,2wo] + x[n,c,2ho+i,2wo+1])
    #                      = 0.5*(tap(c, ki=i+1, kj=1) + tap(c, ki=i+1, kj=2))
    upd = jnp.zeros_like(weight)
    c_idx = jnp.arange(C)
    for i in (0, 1):
        for j in (0, 1):
            upd = upd.at[c_idx * 2 + i, c_idx, i + 1, j + 1].add(0.5)
    # (3,3,Cout,C) -> (9, Cout, C), tap index t = 3*ki + kj
    w_taps = (weight + upd).transpose(2, 3, 0, 1).reshape(9, Cout, C).astype(x.dtype)
    b_col = bias.reshape(Cout, 1).astype(jnp.float32)

    # ---- tiling: big lane-dense tiles, per-generation VMEM budget ----
    LANE = 128
    unit = Wo * LANE // math.gcd(Wo, LANE)          # tiles respect both Wo and 128
    cap = _vmem_capacity_bytes()
    budget = cap // 4                               # headroom under the scoped limit
    vmem_limit = int(min(cap // 2, 128 * 1024 * 1024))

    def stream_bytes(t):                            # double-buffered ins + out tiles
        return 2 * (6 * C + Cout) * t * itemsize

    # target >= ~2 MiB of streamed input per grid step (amortize ~0.35us/step)
    target = max(unit, (2 * 1024 * 1024) // max(1, 6 * C * itemsize))
    max_tm = pl.cdiv(HoWo, unit) * unit
    tm = min(max(unit, (target // unit) * unit), max_tm)
    tm_fit = max(unit, (budget // (2 * (6 * C + Cout) * itemsize)) // unit * unit)
    tm = min(tm, tm_fit)
    assert stream_bytes(tm) <= budget, (
        "tile does not fit VMEM; TODO(synk): fall back to manual-DMA row streaming")

    # keep >= 4 total grid steps (>= 2 per v7x TensorCore) when the problem allows
    if N * pl.cdiv(HoWo, tm) < 4 and tm > unit:
        want = pl.cdiv(4, N)
        tm = min(tm, max(unit, pl.cdiv(pl.cdiv(HoWo, want), unit) * unit))

    n_j = pl.cdiv(HoWo, tm)
    Wp = n_j * tm
    grid = (N, n_j)
    total_steps = N * n_j
    dims = ("parallel", "parallel") if total_steps >= 4 else ("arbitrary", "arbitrary")

    # ---- parity-split quadrants, lane-dense (N, C, Ho*Wo), padded to Wp ----
    q = x.reshape(N, C, Ho, 2, Wo, 2)               # q[n,c,ho,i,wo,j] = x[n,c,2ho+i,2wo+j]
    ee4 = q[:, :, :, 0, :, 0]
    eo4 = q[:, :, :, 0, :, 1]
    oe4 = q[:, :, :, 1, :, 0]
    oo4 = q[:, :, :, 1, :, 1]
    zrow = jnp.zeros((N, C, 1, Wo), x.dtype)
    oeu4 = jnp.concatenate([zrow, oe4[:, :, :-1, :]], axis=2)   # row ho-1 (zero at ho=0)
    oou4 = jnp.concatenate([zrow, oo4[:, :, :-1, :]], axis=2)

    def flat(a4):
        a = a4.reshape(N, C, HoWo)
        if Wp != HoWo:
            a = jnp.pad(a, ((0, 0), (0, 0), (0, Wp - HoWo)))
        return a

    slabs = [flat(a) for a in (ee4, eo4, oe4, oo4, oeu4, oou4)]

    slab_spec = pl.BlockSpec((1, C, tm), lambda n, j: (n, 0, j))
    in_specs = [
        pl.BlockSpec((9, Cout, C), lambda n, j: (0, 0, 0)),   # folded taps (resident)
        pl.BlockSpec((Cout, 1), lambda n, j: (0, 0)),         # bias column (resident)
    ] + [slab_spec] * 6
    out_spec = pl.BlockSpec((1, Cout, tm), lambda n, j: (n, 0, j))

    cost = pl.CostEstimate(
        flops=2 * 9 * Cout * C * N * HoWo,
        transcendentals=0,
        bytes_accessed=int(itemsize * (6 * C + Cout) * N * Wp
                           + itemsize * 9 * Cout * C + 4 * Cout),
    )

    out = pl.pallas_call(
        functools.partial(_tap_kernel, wo=Wo),
        out_shape=jax.ShapeDtypeStruct((N, Cout, Wp), x.dtype),
        grid_spec=pltpu.PrefetchScalarGridSpec(
            num_scalar_prefetch=0,
            grid=grid,
            in_specs=in_specs,
            out_specs=out_spec,
        ),
        compiler_params=pltpu.CompilerParams(
            dimension_semantics=dims,
            vmem_limit_bytes=vmem_limit,
        ),
        cost_estimate=cost,
    )(w_taps, b_col, *slabs)

    if Wp != HoWo:
        out = out[:, :, :HoWo]
    return out.reshape(N, Cout, Ho, Wo)             # free reshape, no transpose


def _reference(x, weight, bias, factor=2, avg_channels=2):
    """Pure-JAX reference mirroring the PyTorch forward (for verification)."""
    N, C, H, W = x.shape
    Cout = weight.shape[0]
    pad = factor // 2
    conv = lax.conv_general_dilated(
        x, weight, window_strides=(factor, factor),
        padding=[(pad, pad), (pad, pad)],
        dimension_numbers=("NCHW", "OIHW", "NCHW"),
        precision=lax.Precision.HIGHEST,
    ) + bias.reshape(1, Cout, 1, 1)
    Ho, Wo = H // factor, W // factor
    xu = x.reshape(N, C, Ho, factor, Wo, factor).transpose(0, 1, 3, 5, 2, 4)
    xu = xu.reshape(N, C * factor * factor, Ho, Wo)
    res = xu.reshape(N, C * factor * factor // avg_channels, avg_channels, Ho, Wo).mean(axis=2)
    return conv + res


if __name__ == "__main__":
    key = jax.random.PRNGKey(0)
    k1, k2, k3 = jax.random.split(key, 3)

    # factor=2, avg_channels=2 => out_channels must be in_channels*4/2
    N, Cin, H, W = 2, 4, 16, 16
    Cout = Cin * 2
    kh = kw = 3

    x = jax.random.normal(k1, (N, Cin, H, W), dtype=jnp.float32)
    fan_in = Cin * kh * kw
    bound = float(1.0 / (fan_in ** 0.5))
    weight = jax.random.uniform(k2, (Cout, Cin, kh, kw), jnp.float32, -bound, bound)
    bias = jax.random.uniform(k3, (Cout,), jnp.float32, -bound, bound)

    out = downsample_with_skip(x, weight, bias)
    out = jax.block_until_ready(out)

    ref = _reference(x, weight, bias)
    assert out.shape == (N, Cout, H // 2, W // 2), out.shape
    assert jnp.allclose(out, ref, atol=1e-5, rtol=1e-5), float(jnp.max(jnp.abs(out - ref)))
    print("KERNEL_OK")
</pallas_src>

<mosaic_0001>
module attributes {stable_mosaic.version = 11 : i64} {
  func.func @_tap_kernel(%arg0: i32, %arg1: i32, %arg2: memref<9x8x4xf32, #tpu.memory_space<vmem>>, %arg3: memref<8x1xf32, #tpu.memory_space<vmem>>, %arg4: memref<1x4x128xf32, #tpu.memory_space<vmem>>, %arg5: memref<1x4x128xf32, #tpu.memory_space<vmem>>, %arg6: memref<1x4x128xf32, #tpu.memory_space<vmem>>, %arg7: memref<1x4x128xf32, #tpu.memory_space<vmem>>, %arg8: memref<1x4x128xf32, #tpu.memory_space<vmem>>, %arg9: memref<1x4x128xf32, #tpu.memory_space<vmem>>, %arg10: memref<1x8x128xf32, #tpu.memory_space<vmem>>) attributes {dimension_semantics = [#tpu.dimension_semantics<arbitrary>, #tpu.dimension_semantics<arbitrary>], iteration_bounds = array<i64: 2, 1>, scalar_prefetch = 0 : i64, scratch_operands = 0 : i64, tpu.core_type = #tpu.core_type<tc>, window_params = [{pipeline_mode = #tpu.pipeline_mode<synchronous>, transform_indices = @transform_0, window_bounds = array<i64: 9, 8, 4>}, {pipeline_mode = #tpu.pipeline_mode<synchronous>, transform_indices = @transform_1, window_bounds = array<i64: 8, 1>}, {transform_indices = @transform_2, window_bounds = array<i64: 1, 4, 128>}, {transform_indices = @transform_3, window_bounds = array<i64: 1, 4, 128>}, {transform_indices = @transform_4, window_bounds = array<i64: 1, 4, 128>}, {transform_indices = @transform_5, window_bounds = array<i64: 1, 4, 128>}, {transform_indices = @transform_6, window_bounds = array<i64: 1, 4, 128>}, {transform_indices = @transform_7, window_bounds = array<i64: 1, 4, 128>}, {transform_indices = @transform_8, window_bounds = array<i64: 1, 8, 128>}]} {
    %c0 = arith.constant 0 : index
    %c0_0 = arith.constant 0 : index
    %c0_1 = arith.constant 0 : index
    %0 = vector.load %arg4[%c0, %c0_0, %c0_1] : memref<1x4x128xf32, #tpu.memory_space<vmem>>, vector<1x4x128xf32>
    %1 = vector.shape_cast %0 : vector<1x4x128xf32> to vector<4x128xf32>
    %c0_2 = arith.constant 0 : index
    %c0_3 = arith.constant 0 : index
    %c0_4 = arith.constant 0 : index
    %2 = vector.load %arg5[%c0_2, %c0_3, %c0_4] : memref<1x4x128xf32, #tpu.memory_space<vmem>>, vector<1x4x128xf32>
    %3 = vector.shape_cast %2 : vector<1x4x128xf32> to vector<4x128xf32>
    %c0_5 = arith.constant 0 : index
    %c0_6 = arith.constant 0 : index
    %c0_7 = arith.constant 0 : index
    %4 = vector.load %arg6[%c0_5, %c0_6, %c0_7] : memref<1x4x128xf32, #tpu.memory_space<vmem>>, vector<1x4x128xf32>
    %5 = vector.shape_cast %4 : vector<1x4x128xf32> to vector<4x128xf32>
    %c0_8 = arith.constant 0 : index
    %c0_9 = arith.constant 0 : index
    %c0_10 = arith.constant 0 : index
    %6 = vector.load %arg7[%c0_8, %c0_9, %c0_10] : memref<1x4x128xf32, #tpu.memory_space<vmem>>, vector<1x4x128xf32>
    %7 = vector.shape_cast %6 : vector<1x4x128xf32> to vector<4x128xf32>
    %c0_11 = arith.constant 0 : index
    %c0_12 = arith.constant 0 : index
    %c0_13 = arith.constant 0 : index
    %8 = vector.load %arg8[%c0_11, %c0_12, %c0_13] : memref<1x4x128xf32, #tpu.memory_space<vmem>>, vector<1x4x128xf32>
    %9 = vector.shape_cast %8 : vector<1x4x128xf32> to vector<4x128xf32>
    %c0_14 = arith.constant 0 : index
    %c0_15 = arith.constant 0 : index
    %c0_16 = arith.constant 0 : index
    %10 = vector.load %arg9[%c0_14, %c0_15, %c0_16] : memref<1x4x128xf32, #tpu.memory_space<vmem>>, vector<1x4x128xf32>
    %11 = vector.shape_cast %10 : vector<1x4x128xf32> to vector<4x128xf32>
    %12 = tpu.iota {dimensions = array<i32: 1>} : vector<1x128xi32>
    %c8_i32 = arith.constant 8 : i32
    %c0_i32 = arith.constant 0 : i32
    %13 = arith.cmpi eq, %c8_i32, %c0_i32 : i32
    %c1_i32 = arith.constant 1 : i32
    %14 = arith.select %13, %c1_i32, %c8_i32 : i32
    %15 = vector.broadcast %14 : i32 to vector<1x128xi32>
    %16 = arith.remsi %12, %15 : vector<1x128xi32>
    %c0_i32_17 = arith.constant 0 : i32
    %17 = vector.broadcast %c0_i32_17 : i32 to vector<1x128xi32>
    %18 = arith.cmpi ne, %16, %17 : vector<1x128xi32>
    %c0_i32_18 = arith.constant 0 : i32
    %19 = vector.broadcast %c0_i32_18 : i32 to vector<1x128xi32>
    %20 = arith.cmpi slt, %16, %19 : vector<1x128xi32>
    %c0_i32_19 = arith.constant 0 : i32
    %21 = arith.cmpi slt, %14, %c0_i32_19 : i32
    %22 = vector.broadcast %21 : i1 to vector<1x128xi1>
    %23 = vector.broadcast %22 : vector<1x128xi1> to vector<1x128xi1>
    %24 = arith.xori %20, %23 : vector<1x128xi1>
    %25 = arith.andi %24, %18 : vector<1x128xi1>
    %26 = vector.broadcast %14 : i32 to vector<1x128xi32>
    %27 = arith.addi %16, %26 : vector<1x128xi32>
    %28 = arith.select %25, %27, %16 : vector<1x128xi1>, vector<1x128xi32>
    %c0_i32_20 = arith.constant 0 : i32
    %29 = vector.broadcast %c0_i32_20 : i32 to vector<1x128xi32>
    %30 = arith.cmpi ne, %28, %29 : vector<1x128xi32>
    %c4 = arith.constant 4 : index
    %c0_21 = arith.constant 0 : index
    %c0_22 = arith.constant 0 : index
    %31 = vector.load %arg2[%c4, %c0_21, %c0_22] : memref<9x8x4xf32, #tpu.memory_space<vmem>>, vector<1x8x4xf32>
    %32 = vector.shape_cast %31 : vector<1x8x4xf32> to vector<8x4xf32>
    %cst = arith.constant dense<0.000000e+00> : vector<8x128xf32>
    %33 = tpu.matmul %32, %1, %cst {dimension_numbers = #tpu.dot_dimension_numbers<[1], [0], [0], [1], [0, 0, 1, 1], [], []>, precision = #tpu.contract_precision<fp32>} : vector<8x4xf32>, vector<4x128xf32>, vector<8x128xf32> -> vector<8x128xf32>
    %c5 = arith.constant 5 : index
    %c0_23 = arith.constant 0 : index
    %c0_24 = arith.constant 0 : index
    %34 = vector.load %arg2[%c5, %c0_23, %c0_24] : memref<9x8x4xf32, #tpu.memory_space<vmem>>, vector<1x8x4xf32>
    %35 = vector.shape_cast %34 : vector<1x8x4xf32> to vector<8x4xf32>
    %cst_25 = arith.constant dense<0.000000e+00> : vector<8x128xf32>
    %36 = tpu.matmul %35, %3, %cst_25 {dimension_numbers = #tpu.dot_dimension_numbers<[1], [0], [0], [1], [0, 0, 1, 1], [], []>, precision = #tpu.contract_precision<fp32>} : vector<8x4xf32>, vector<4x128xf32>, vector<8x128xf32> -> vector<8x128xf32>
    %37 = arith.addf %33, %36 : vector<8x128xf32>
    %cst_26 = arith.constant 0.000000e+00 : f32
    %38 = vector.broadcast %cst_26 : f32 to vector<4x1xf32>
    %39 = vector.extract_strided_slice %3 {offsets = [0, 0], sizes = [4, 127], strides = [1, 1]} : vector<4x128xf32> to vector<4x127xf32>
    %40 = tpu.concatenate %38, %39 in 1 : vector<4x1xf32>, vector<4x127xf32> -> vector<4x128xf32>
    %cst_27 = arith.constant 0.000000e+00 : f32
    %41 = vector.broadcast %cst_27 : f32 to vector<4x128xf32>
    %42 = vector.shape_cast %30 : vector<1x128xi1> to vector<1x128xi1>
    %43 = vector.broadcast %42 : vector<1x128xi1> to vector<4x128xi1>
    %44 = arith.select %43, %40, %41 : vector<4x128xi1>, vector<4x128xf32>
    %c3 = arith.constant 3 : index
    %c0_28 = arith.constant 0 : index
    %c0_29 = arith.constant 0 : index
    %45 = vector.load %arg2[%c3, %c0_28, %c0_29] : memref<9x8x4xf32, #tpu.memory_space<vmem>>, vector<1x8x4xf32>
    %46 = vector.shape_cast %45 : vector<1x8x4xf32> to vector<8x4xf32>
    %cst_30 = arith.constant dense<0.000000e+00> : vector<8x128xf32>
    %47 = tpu.matmul %46, %44, %cst_30 {dimension_numbers = #tpu.dot_dimension_numbers<[1], [0], [0], [1], [0, 0, 1, 1], [], []>, precision = #tpu.contract_precision<fp32>} : vector<8x4xf32>, vector<4x128xf32>, vector<8x128xf32> -> vector<8x128xf32>
    %48 = arith.addf %37, %47 : vector<8x128xf32>
    %c7 = arith.constant 7 : index
    %c0_31 = arith.constant 0 : index
    %c0_32 = arith.constant 0 : index
    %49 = vector.load %arg2[%c7, %c0_31, %c0_32] : memref<9x8x4xf32, #tpu.memory_space<vmem>>, vector<1x8x4xf32>
    %50 = vector.shape_cast %49 : vector<1x8x4xf32> to vector<8x4xf32>
    %cst_33 = arith.constant dense<0.000000e+00> : vector<8x128xf32>
    %51 = tpu.matmul %50, %5, %cst_33 {dimension_numbers = #tpu.dot_dimension_numbers<[1], [0], [0], [1], [0, 0, 1, 1], [], []>, precision = #tpu.contract_precision<fp32>} : vector<8x4xf32>, vector<4x128xf32>, vector<8x128xf32> -> vector<8x128xf32>
    %52 = arith.addf %48, %51 : vector<8x128xf32>
    %c1 = arith.constant 1 : index
    %c0_34 = arith.constant 0 : index
    %c0_35 = arith.constant 0 : index
    %53 = vector.load %arg2[%c1, %c0_34, %c0_35] : memref<9x8x4xf32, #tpu.memory_space<vmem>>, vector<1x8x4xf32>
    %54 = vector.shape_cast %53 : vector<1x8x4xf32> to vector<8x4xf32>
    %cst_36 = arith.constant dense<0.000000e+00> : vector<8x128xf32>
    %55 = tpu.matmul %54, %9, %cst_36 {dimension_numbers = #tpu.dot_dimension_numbers<[1], [0], [0], [1], [0, 0, 1, 1], [], []>, precision = #tpu.contract_precision<fp32>} : vector<8x4xf32>, vector<4x128xf32>, vector<8x128xf32> -> vector<8x128xf32>
    %56 = arith.addf %52, %55 : vector<8x128xf32>
    %c8 = arith.constant 8 : index
    %c0_37 = arith.constant 0 : index
    %c0_38 = arith.constant 0 : index
    %57 = vector.load %arg2[%c8, %c0_37, %c0_38] : memref<9x8x4xf32, #tpu.memory_space<vmem>>, vector<1x8x4xf32>
    %58 = vector.shape_cast %57 : vector<1x8x4xf32> to vector<8x4xf32>
    %cst_39 = arith.constant dense<0.000000e+00> : vector<8x128xf32>
    %59 = tpu.matmul %58, %7, %cst_39 {dimension_numbers = #tpu.dot_dimension_numbers<[1], [0], [0], [1], [0, 0, 1, 1], [], []>, precision = #tpu.contract_precision<fp32>} : vector<8x4xf32>, vector<4x128xf32>, vector<8x128xf32> -> vector<8x128xf32>
    %60 = arith.addf %56, %59 : vector<8x128xf32>
    %cst_40 = arith.constant 0.000000e+00 : f32
    %61 = vector.broadcast %cst_40 : f32 to vector<4x1xf32>
    %62 = vector.extract_strided_slice %7 {offsets = [0, 0], sizes = [4, 127], strides = [1, 1]} : vector<4x128xf32> to vector<4x127xf32>
    %63 = tpu.concatenate %61, %62 in 1 : vector<4x1xf32>, vector<4x127xf32> -> vector<4x128xf32>
    %cst_41 = arith.constant 0.000000e+00 : f32
    %64 = vector.broadcast %cst_41 : f32 to vector<4x128xf32>
    %65 = vector.shape_cast %30 : vector<1x128xi1> to vector<1x128xi1>
    %66 = vector.broadcast %65 : vector<1x128xi1> to vector<4x128xi1>
    %67 = arith.select %66, %63, %64 : vector<4x128xi1>, vector<4x128xf32>
    %c6 = arith.constant 6 : index
    %c0_42 = arith.constant 0 : index
    %c0_43 = arith.constant 0 : index
    %68 = vector.load %arg2[%c6, %c0_42, %c0_43] : memref<9x8x4xf32, #tpu.memory_space<vmem>>, vector<1x8x4xf32>
    %69 = vector.shape_cast %68 : vector<1x8x4xf32> to vector<8x4xf32>
    %cst_44 = arith.constant dense<0.000000e+00> : vector<8x128xf32>
    %70 = tpu.matmul %69, %67, %cst_44 {dimension_numbers = #tpu.dot_dimension_numbers<[1], [0], [0], [1], [0, 0, 1, 1], [], []>, precision = #tpu.contract_precision<fp32>} : vector<8x4xf32>, vector<4x128xf32>, vector<8x128xf32> -> vector<8x128xf32>
    %71 = arith.addf %60, %70 : vector<8x128xf32>
    %c2 = arith.constant 2 : index
    %c0_45 = arith.constant 0 : index
    %c0_46 = arith.constant 0 : index
    %72 = vector.load %arg2[%c2, %c0_45, %c0_46] : memref<9x8x4xf32, #tpu.memory_space<vmem>>, vector<1x8x4xf32>
    %73 = vector.shape_cast %72 : vector<1x8x4xf32> to vector<8x4xf32>
    %cst_47 = arith.constant dense<0.000000e+00> : vector<8x128xf32>
    %74 = tpu.matmul %73, %11, %cst_47 {dimension_numbers = #tpu.dot_dimension_numbers<[1], [0], [0], [1], [0, 0, 1, 1], [], []>, precision = #tpu.contract_precision<fp32>} : vector<8x4xf32>, vector<4x128xf32>, vector<8x128xf32> -> vector<8x128xf32>
    %75 = arith.addf %71, %74 : vector<8x128xf32>
    %cst_48 = arith.constant 0.000000e+00 : f32
    %76 = vector.broadcast %cst_48 : f32 to vector<4x1xf32>
    %77 = vector.extract_strided_slice %11 {offsets = [0, 0], sizes = [4, 127], strides = [1, 1]} : vector<4x128xf32> to vector<4x127xf32>
    %78 = tpu.concatenate %76, %77 in 1 : vector<4x1xf32>, vector<4x127xf32> -> vector<4x128xf32>
    %cst_49 = arith.constant 0.000000e+00 : f32
    %79 = vector.broadcast %cst_49 : f32 to vector<4x128xf32>
    %80 = vector.shape_cast %30 : vector<1x128xi1> to vector<1x128xi1>
    %81 = vector.broadcast %80 : vector<1x128xi1> to vector<4x128xi1>
    %82 = arith.select %81, %78, %79 : vector<4x128xi1>, vector<4x128xf32>
    %c0_50 = arith.constant 0 : index
    %c0_51 = arith.constant 0 : index
    %c0_52 = arith.constant 0 : index
    %83 = vector.load %arg2[%c0_50, %c0_51, %c0_52] : memref<9x8x4xf32, #tpu.memory_space<vmem>>, vector<1x8x4xf32>
    %84 = vector.shape_cast %83 : vector<1x8x4xf32> to vector<8x4xf32>
    %cst_53 = arith.constant dense<0.000000e+00> : vector<8x128xf32>
    %85 = tpu.matmul %84, %82, %cst_53 {dimension_numbers = #tpu.dot_dimension_numbers<[1], [0], [0], [1], [0, 0, 1, 1], [], []>, precision = #tpu.contract_precision<fp32>} : vector<8x4xf32>, vector<4x128xf32>, vector<8x128xf32> -> vector<8x128xf32>
    %86 = arith.addf %75, %85 : vector<8x128xf32>
    %c0_54 = arith.constant 0 : index
    %c0_55 = arith.constant 0 : index
    %87 = vector.load %arg3[%c0_54, %c0_55] : memref<8x1xf32, #tpu.memory_space<vmem>>, vector<8x1xf32>
    %88 = vector.broadcast %87 : vector<8x1xf32> to vector<8x128xf32>
    %89 = arith.addf %86, %88 : vector<8x128xf32>
    %c0_56 = arith.constant 0 : index
    %c0_57 = arith.constant 0 : index
    %c0_58 = arith.constant 0 : index
    %90 = vector.load %arg10[%c0_56, %c0_57, %c0_58] : memref<1x8x128xf32, #tpu.memory_space<vmem>>, vector<1x8x128xf32>
    %91 = vector.shape_cast %90 : vector<1x8x128xf32> to vector<8x128xf32>
    %92 = vector.shape_cast %89 : vector<8x128xf32> to vector<1x8x128xf32>
    tpu.vector_store %arg10[%c0_56, %c0_57, %c0_58], %92 {strides = array<i32>} : memref<1x8x128xf32, #tpu.memory_space<vmem>>, vector<1x8x128xf32>,
    return
  }
  func.func @transform_0(%arg0: i32, %arg1: i32) -> (i32, i32, i32) {
    %c0_i32 = arith.constant 0 : i32
    %c0_i32_0 = arith.constant 0 : i32
    %c0_i32_1 = arith.constant 0 : i32
    %c0_i32_2 = arith.constant 0 : i32
    return %c0_i32, %c0_i32_0, %c0_i32_1 : i32, i32, i32
  }
  func.func @transform_1(%arg0: i32, %arg1: i32) -> (i32, i32) {
    %c0_i32 = arith.constant 0 : i32
    %c0_i32_0 = arith.constant 0 : i32
    %c0_i32_1 = arith.constant 0 : i32
    return %c0_i32, %c0_i32_0 : i32, i32
  }
  func.func @transform_2(%arg0: i32, %arg1: i32) -> (i32, i32, i32) {
    %c0_i32 = arith.constant 0 : i32
    %c0_i32_0 = arith.constant 0 : i32
    return %arg0, %c0_i32, %arg1 : i32, i32, i32
  }
  func.func @transform_3(%arg0: i32, %arg1: i32) -> (i32, i32, i32) {
    %c0_i32 = arith.constant 0 : i32
    %c0_i32_0 = arith.constant 0 : i32
    return %arg0, %c0_i32, %arg1 : i32, i32, i32
  }
  func.func @transform_4(%arg0: i32, %arg1: i32) -> (i32, i32, i32) {
    %c0_i32 = arith.constant 0 : i32
    %c0_i32_0 = arith.constant 0 : i32
    return %arg0, %c0_i32, %arg1 : i32, i32, i32
  }
  func.func @transform_5(%arg0: i32, %arg1: i32) -> (i32, i32, i32) {
    %c0_i32 = arith.constant 0 : i32
    %c0_i32_0 = arith.constant 0 : i32
    return %arg0, %c0_i32, %arg1 : i32, i32, i32
  }
  func.func @transform_6(%arg0: i32, %arg1: i32) -> (i32, i32, i32) {
    %c0_i32 = arith.constant 0 : i32
    %c0_i32_0 = arith.constant 0 : i32
    return %arg0, %c0_i32, %arg1 : i32, i32, i32
  }
  func.func @transform_7(%arg0: i32, %arg1: i32) -> (i32, i32, i32) {
    %c0_i32 = arith.constant 0 : i32
    %c0_i32_0 = arith.constant 0 : i32
    return %arg0, %c0_i32, %arg1 : i32, i32, i32
  }
  func.func @transform_8(%arg0: i32, %arg1: i32) -> (i32, i32, i32) {
    %c0_i32 = arith.constant 0 : i32
    %c0_i32_0 = arith.constant 0 : i32
    return %arg0, %c0_i32, %arg1 : i32, i32, i32
  }
}

</mosaic_0001>

<llo_original>
// kernel: tpu_custom_call.1
$region0: #{tpu_custom_call.1}
  #allocation0 [shape = 'u32[]', space=smem, size = 0x4, offset = 0x4, fixed_abs, tag = 'smem constant byte address 0x4 - core index']
  #allocation1 [shape = 'u32[72,128]{1,0:T(1,128)}', space=vmem, size = 0x9000, scoped, tag = 'internal scratch']
  %s0 = inlined_call_operand.vmem [shape: f32[9,8,4], index: 0, kind: input, shape index: {}]
  %s1 = inlined_call_operand.vmem [shape: f32[8,1], index: 1, kind: input, shape index: {}]
  %s2 = inlined_call_operand.vmem [shape: f32[2,4,128], index: 2, kind: input, shape index: {}]
  %s3 = inlined_call_operand.vmem [shape: f32[2,4,128], index: 3, kind: input, shape index: {}]
  %s4 = inlined_call_operand.vmem [shape: f32[2,4,128], index: 4, kind: input, shape index: {}]
  %s5 = inlined_call_operand.vmem [shape: f32[2,4,128], index: 5, kind: input, shape index: {}]
  %s6 = inlined_call_operand.vmem [shape: f32[2,4,128], index: 6, kind: input, shape index: {}]
  %s7 = inlined_call_operand.vmem [shape: f32[2,4,128], index: 7, kind: input, shape index: {}]
  %s8 = inlined_call_operand.hbm [shape: f32[2,8,128], index: 8, kind: output, shape index: {}]
  %s9 = sld [smem:[#allocation0]]
  $region65: #{tpu_custom_call.1} parent=0
    _
  %s11 = ssub.s32 1, %s9
  %s12 = scalar_select 0, %s11, %s9
  $region1: #{tpu_custom_call.1} parent=0
    #allocation2 [shape = 'u8[8192]{0}', space=vmem, size = 0x2000, scoped, tag = 'output window, operand 0']
    #allocation3 [shape = 's32[2]{0}', space=sflag, size = 0x8, scoped, tag = 'scoped memory for tpu_custom_call.1']
    %13 = vsyncpa [#allocation3], 0
    %s14 = scalar_lea.sflag [#allocation3], 1
    %15 = vsyncpa %s14, 0
    loop: start=0, step=1, limit=4
    $region2: #{tpu_custom_call.1} parent=1 // loop_pre_header
      _
    $region3: #{tpu_custom_call.1} parent=1 // loop_header
      %s17 = sphi 0, %s21
      %p18 = scmp.ge.s32.totalorder %s17, 4
      %s24 = sphi 0, %s36
      %s25 = sphi 0, %s32
      %s26 = sphi 0, %s24
      %s27 = sphi 0, %s25
      %s28 = sphi 0, %s26
      %s29 = sphi 0, %s27
      %s37 = sphi 0, %s37
      %s39 = sphi 0, %s37
      %s40 = sphi 0, %s39
      %s54 = sphi 0, %s40
      %s58 = sphi 0, %s58
      %s60 = sphi 0, %s58
      %s61 = sphi 0, %s60
      %s75 = sphi 0, %s61
      %s83 = sphi 0, %s85
      %s86 = sphi 0, %s83
      %s87 = sphi 0, %s86
      %s103 = sphi 0, %s87
      %s111 = sphi 0, %s113
      %s114 = sphi 0, %s111
      %s115 = sphi 0, %s114
      %s131 = sphi 0, %s115
      %s139 = sphi 0, %s141
      %s142 = sphi 0, %s139
      %s143 = sphi 0, %s142
      %s159 = sphi 0, %s143
      %s167 = sphi 0, %s169
      %s170 = sphi 0, %s167
      %s171 = sphi 0, %s170
      %s187 = sphi 0, %s171
      %s195 = sphi 0, %s197
      %s198 = sphi 0, %s195
      %s199 = sphi 0, %s198
      %s215 = sphi 0, %s199
      %s223 = sphi 0, %s225
      %s226 = sphi 0, %s223
      %s227 = sphi 0, %s226
      %s243 = sphi 0, %s227
      %s251 = sphi 0, %s253
      %s254 = sphi 0, %s251
      %s255 = sphi 0, %s254
      %s271 = sphi 0, %s255
    $region4: #{tpu_custom_call.1} parent=1 // loop_header_branch
      %20 = sbr.rel (%p18) target = $region8
    $region5: #{tpu_custom_call.1} parent=1 // loop_body
      %s22 = ssub.s32 %s17, 1
      %s23 = ssub.s32 %s17, 2
      %s30 = sadd.s32 1, %s25
      %p31 = scmp.ge.s32.totalorder %s30, 1
      %s32 = scalar_select %p31, 0, %s30
      %s33 = sadd.s32 1, %s24
      %s34 = scalar_select %p31, %s33, %s24
      %p35 = scmp.ge.s32.totalorder %s34, 2
      %s36 = scalar_select %p35, 0, %s34
      %s38 = sadd.s32 %s37, 1
      %p41 = scmp.eq.s32.totalorder %s17, 1
      %p42 = scmp.ne.s32.totalorder %s37, %s39
      %p43 = scmp.eq.s32.totalorder %s17, 0
      %p44 = por %p42, %p43
      %p45 = scmp.ne.s32.totalorder %s37, %s39
      %p46 = scmp.eq.s32.totalorder %s22, 1
      %p47 = por %p45, %p46
      %p48 = scmp.ne.s32.totalorder %s39, %s40
      %p49 = scmp.eq.s32.totalorder %s22, 0
      %p50 = por %p48, %p49
      %p51 = scmp.ne.s32.totalorder %s39, %s40
      %p52 = scmp.eq.s32.totalorder %s23, 1
      %p53 = por %p51, %p52
      %p55 = scmp.ne.s32.totalorder %s40, %s54
      %p56 = scmp.eq.s32.totalorder %s23, 0
      %p57 = por %p55, %p56
      %s59 = sadd.s32 %s58, 1
      %p62 = scmp.eq.s32.totalorder %s17, 1
      %p63 = scmp.ne.s32.totalorder %s58, %s60
      %p64 = scmp.eq.s32.totalorder %s17, 0
      %p65 = por %p63, %p64
      %p66 = scmp.ne.s32.totalorder %s58, %s60
      %p67 = scmp.eq.s32.totalorder %s22, 1
      %p68 = por %p66, %p67
      %p69 = scmp.ne.s32.totalorder %s60, %s61
      %p70 = scmp.eq.s32.totalorder %s22, 0
      %p71 = por %p69, %p70
      %p72 = scmp.ne.s32.totalorder %s60, %s61
      %p73 = scmp.eq.s32.totalorder %s23, 1
      %p74 = por %p72, %p73
      %p76 = scmp.ne.s32.totalorder %s61, %s75
      %p77 = scmp.eq.s32.totalorder %s23, 0
      %p78 = por %p76, %p77
      %s79 = ssub.s32 %s24, %s36
      %s80 = ssub.s32 %s25, %s32
      %s81 = sor.u32 %s79, %s80
      %p82 = scmp.eq.s32.totalorder %s81, 0
      %s84 = sadd.s32 %s83, 1
      %s85 = scalar_select %p82, %s83, %s84
      %p88 = pneg %p82
      %p89 = scmp.eq.s32.totalorder %s17, 1
      %p90 = por %p88, %p89
      %p91 = scmp.ne.s32.totalorder %s83, %s86
      %p92 = scmp.eq.s32.totalorder %s17, 0
      %p93 = por %p91, %p92
      %p94 = scmp.ne.s32.totalorder %s83, %s86
      %p95 = scmp.eq.s32.totalorder %s22, 1
      %p96 = por %p94, %p95
      %p97 = scmp.ne.s32.totalorder %s86, %s87
      %p98 = scmp.eq.s32.totalorder %s22, 0
      %p99 = por %p97, %p98
      %p100 = scmp.ne.s32.totalorder %s86, %s87
      %p101 = scmp.eq.s32.totalorder %s23, 1
      %p102 = por %p100, %p101
      %p104 = scmp.ne.s32.totalorder %s87, %s103
      %p105 = scmp.eq.s32.totalorder %s23, 0
      %p106 = por %p104, %p105
      %s107 = ssub.s32 %s24, %s36
      %s108 = ssub.s32 %s25, %s32
      %s109 = sor.u32 %s107, %s108
      %p110 = scmp.eq.s32.totalorder %s109, 0
      %s112 = sadd.s32 %s111, 1
      %s113 = scalar_select %p110, %s111, %s112
      %p116 = pneg %p110
      %p117 = scmp.eq.s32.totalorder %s17, 1
      %p118 = por %p116, %p117
      %p119 = scmp.ne.s32.totalorder %s111, %s114
      %p120 = scmp.eq.s32.totalorder %s17, 0
      %p121 = por %p119, %p120
      %p122 = scmp.ne.s32.totalorder %s111, %s114
      %p123 = scmp.eq.s32.totalorder %s22, 1
      %p124 = por %p122, %p123
      %p125 = scmp.ne.s32.totalorder %s114, %s115
      %p126 = scmp.eq.s32.totalorder %s22, 0
      %p127 = por %p125, %p126
      %p128 = scmp.ne.s32.totalorder %s114, %s115
      %p129 = scmp.eq.s32.totalorder %s23, 1
      %p130 = por %p128, %p129
      %p132 = scmp.ne.s32.totalorder %s115, %s131
      %p133 = scmp.eq.s32.totalorder %s23, 0
      %p134 = por %p132, %p133
      %s135 = ssub.s32 %s24, %s36
      %s136 = ssub.s32 %s25, %s32
      %s137 = sor.u32 %s135, %s136
      %p138 = scmp.eq.s32.totalorder %s137, 0
      %s140 = sadd.s32 %s139, 1
      %s141 = scalar_select %p138, %s139, %s140
      %p144 = pneg %p138
      %p145 = scmp.eq.s32.totalorder %s17, 1
      %p146 = por %p144, %p145
      %p147 = scmp.ne.s32.totalorder %s139, %s142
      %p148 = scmp.eq.s32.totalorder %s17, 0
      %p149 = por %p147, %p148
      %p150 = scmp.ne.s32.totalorder %s139, %s142
      %p151 = scmp.eq.s32.totalorder %s22, 1
      %p152 = por %p150, %p151
      %p153 = scmp.ne.s32.totalorder %s142, %s143
      %p154 = scmp.eq.s32.totalorder %s22, 0
      %p155 = por %p153, %p154
      %p156 = scmp.ne.s32.totalorder %s142, %s143
      %p157 = scmp.eq.s32.totalorder %s23, 1
      %p158 = por %p156, %p157
      %p160 = scmp.ne.s32.totalorder %s143, %s159
      %p161 = scmp.eq.s32.totalorder %s23, 0
      %p162 = por %p160, %p161
      %s163 = ssub.s32 %s24, %s36
      %s164 = ssub.s32 %s25, %s32
      %s165 = sor.u32 %s163, %s164
      %p166 = scmp.eq.s32.totalorder %s165, 0
      %s168 = sadd.s32 %s167, 1
      %s169 = scalar_select %p166, %s167, %s168
      %p172 = pneg %p166
      %p173 = scmp.eq.s32.totalorder %s17, 1
      %p174 = por %p172, %p173
      %p175 = scmp.ne.s32.totalorder %s167, %s170
      %p176 = scmp.eq.s32.totalorder %s17, 0
      %p177 = por %p175, %p176
      %p178 = scmp.ne.s32.totalorder %s167, %s170
      %p179 = scmp.eq.s32.totalorder %s22, 1
      %p180 = por %p178, %p179
      %p181 = scmp.ne.s32.totalorder %s170, %s171
      %p182 = scmp.eq.s32.totalorder %s22, 0
      %p183 = por %p181, %p182
      %p184 = scmp.ne.s32.totalorder %s170, %s171
      %p185 = scmp.eq.s32.totalorder %s23, 1
      %p186 = por %p184, %p185
      %p188 = scmp.ne.s32.totalorder %s171, %s187
      %p189 = scmp.eq.s32.totalorder %s23, 0
      %p190 = por %p188, %p189
      %s191 = ssub.s32 %s24, %s36
      %s192 = ssub.s32 %s25, %s32
      %s193 = sor.u32 %s191, %s192
      %p194 = scmp.eq.s32.totalorder %s193, 0
      %s196 = sadd.s32 %s195, 1
      %s197 = scalar_select %p194, %s195, %s196
      %p200 = pneg %p194
      %p201 = scmp.eq.s32.totalorder %s17, 1
      %p202 = por %p200, %p201
      %p203 = scmp.ne.s32.totalorder %s195, %s198
      %p204 = scmp.eq.s32.totalorder %s17, 0
      %p205 = por %p203, %p204
      %p206 = scmp.ne.s32.totalorder %s195, %s198
      %p207 = scmp.eq.s32.totalorder %s22, 1
      %p208 = por %p206, %p207
      %p209 = scmp.ne.s32.totalorder %s198, %s199
      %p210 = scmp.eq.s32.totalorder %s22, 0
      %p211 = por %p209, %p210
      %p212 = scmp.ne.s32.totalorder %s198, %s199
      %p213 = scmp.eq.s32.totalorder %s23, 1
      %p214 = por %p212, %p213
      %p216 = scmp.ne.s32.totalorder %s199, %s215
      %p217 = scmp.eq.s32.totalorder %s23, 0
      %p218 = por %p216, %p217
      %s219 = ssub.s32 %s24, %s36
      %s220 = ssub.s32 %s25, %s32
      %s221 = sor.u32 %s219, %s220
      %p222 = scmp.eq.s32.totalorder %s221, 0
      %s224 = sadd.s32 %s223, 1
      %s225 = scalar_select %p222, %s223, %s224
      %p228 = pneg %p222
      %p229 = scmp.eq.s32.totalorder %s17, 1
      %p230 = por %p228, %p229
      %p231 = scmp.ne.s32.totalorder %s223, %s226
      %p232 = scmp.eq.s32.totalorder %s17, 0
      %p233 = por %p231, %p232
      %p234 = scmp.ne.s32.totalorder %s223, %s226
      %p235 = scmp.eq.s32.totalorder %s22, 1
      %p236 = por %p234, %p235
      %p237 = scmp.ne.s32.totalorder %s226, %s227
      %p238 = scmp.eq.s32.totalorder %s22, 0
      %p239 = por %p237, %p238
      %p240 = scmp.ne.s32.totalorder %s226, %s227
      %p241 = scmp.eq.s32.totalorder %s23, 1
      %p242 = por %p240, %p241
      %p244 = scmp.ne.s32.totalorder %s227, %s243
      %p245 = scmp.eq.s32.totalorder %s23, 0
      %p246 = por %p244, %p245
      %s247 = ssub.s32 %s24, %s36
      %s248 = ssub.s32 %s25, %s32
      %s249 = sor.u32 %s247, %s248
      %p250 = scmp.eq.s32.totalorder %s249, 0
      %s252 = sadd.s32 %s251, 1
      %s253 = scalar_select %p250, %s251, %s252
      %p256 = pneg %p250
      %p257 = scmp.eq.s32.totalorder %s17, 1
      %p258 = por %p256, %p257
      %p259 = scmp.ne.s32.totalorder %s251, %s254
      %p260 = scmp.eq.s32.totalorder %s17, 0
      %p261 = por %p259, %p260
      %p262 = scmp.ne.s32.totalorder %s251, %s254
      %p263 = scmp.eq.s32.totalorder %s22, 1
      %p264 = por %p262, %p263
      %p265 = scmp.ne.s32.totalorder %s254, %s255
      %p266 = scmp.eq.s32.totalorder %s22, 0
      %p267 = por %p265, %p266
      %p268 = scmp.ne.s32.totalorder %s254, %s255
      %p269 = scmp.eq.s32.totalorder %s23, 1
      %p270 = por %p268, %p269
      %p272 = scmp.ne.s32.totalorder %s255, %s271
      %p273 = scmp.eq.s32.totalorder %s23, 0
      %p274 = por %p272, %p273
      %p275 = scmp.le.s32.totalorder 1, %s17
      %p276 = scmp.lt.s32.totalorder %s17, 3
      %p277 = pnand %p275, %p276
      %p278 = pneg %p277
      // Predicated region
      $region9: #{tpu_custom_call.1} parent=5 // pred_check
        _
      $region10: #{tpu_custom_call.1} parent=5 // pred_check_branch
        %280 = sbr.rel (%p277) target = $region12
      $region11: #{tpu_custom_call.1} parent=5 // pred_region
        %s281 = ssub.s32 %s17, 1
        // Predicated region
        $region13: #{tpu_custom_call.1} parent=11 // pred_check
          %p282 = pneg %p50
        $region14: #{tpu_custom_call.1} parent=11 // pred_check_branch
          %284 = sbr.rel (%p282) target = $region16
        $region15: #{tpu_custom_call.1} parent=11 // pred_region
          _
        $region16: #{tpu_custom_call.1} parent=11 // pred_fallthru
          _
        // Predicated region
        $region17: #{tpu_custom_call.1} parent=11 // pred_check
          %p285 = pneg %p71
        $region18: #{tpu_custom_call.1} parent=11 // pred_check_branch
          %287 = sbr.rel (%p285) target = $region20
        $region19: #{tpu_custom_call.1} parent=11 // pred_region
          _
        $region20: #{tpu_custom_call.1} parent=11 // pred_fallthru
          _
      $region12: #{tpu_custom_call.1} parent=5 // pred_fallthru
        _
      %p288 = scmp.lt.s32.totalorder %s17, 2
      // Predicated region
      $region21: #{tpu_custom_call.1} parent=5 // pred_check
        %p289 = pneg %p288
      $region22: #{tpu_custom_call.1} parent=5 // pred_check_branch
        %291 = sbr.rel (%p289) target = $region24
      $region23: #{tpu_custom_call.1} parent=5 // pred_region
        // Predicated region
        $region25: #{tpu_custom_call.1} parent=23 // pred_check
          %p292 = pneg %p93
        $region26: #{tpu_custom_call.1} parent=23 // pred_check_branch
          %294 = sbr.rel (%p292) target = $region28
        $region27: #{tpu_custom_call.1} parent=23 // pred_region
          %p295 = scmp.lt.s32.totalorder %s24, 1
          %s296 = scalar_select %p295, %s24, 1
          %p297 = scmp.lt.s32.totalorder %s25, 0
          %s298 = scalar_select %p297, %s25, 0
          %s299 = sadd.s32 %s298, %s296
          %s300 = smul.addr %s299, 4
          %s301 = scalar_lea.vmem %s2, %s300
        $region28: #{tpu_custom_call.1} parent=23 // pred_fallthru
          _
        // Predicated region
        $region29: #{tpu_custom_call.1} parent=23 // pred_check
          %p302 = pneg %p121
        $region30: #{tpu_custom_call.1} parent=23 // pred_check_branch
          %304 = sbr.rel (%p302) target = $region32
        $region31: #{tpu_custom_call.1} parent=23 // pred_region
          %p305 = scmp.lt.s32.totalorder %s24, 1
          %s306 = scalar_select %p305, %s24, 1
          %p307 = scmp.lt.s32.totalorder %s25, 0
          %s308 = scalar_select %p307, %s25, 0
          %s309 = sadd.s32 %s308, %s306
          %s310 = smul.addr %s309, 4
          %s311 = scalar_lea.vmem %s3, %s310
        $region32: #{tpu_custom_call.1} parent=23 // pred_fallthru
          _
        // Predicated region
        $region33: #{tpu_custom_call.1} parent=23 // pred_check
          %p312 = pneg %p149
        $region34: #{tpu_custom_call.1} parent=23 // pred_check_branch
          %314 = sbr.rel (%p312) target = $region36
        $region35: #{tpu_custom_call.1} parent=23 // pred_region
          %p315 = scmp.lt.s32.totalorder %s24, 1
          %s316 = scalar_select %p315, %s24, 1
          %p317 = scmp.lt.s32.totalorder %s25, 0
          %s318 = scalar_select %p317, %s25, 0
          %s319 = sadd.s32 %s318, %s316
          %s320 = smul.addr %s319, 4
          %s321 = scalar_lea.vmem %s4, %s320
        $region36: #{tpu_custom_call.1} parent=23 // pred_fallthru
          _
        // Predicated region
        $region37: #{tpu_custom_call.1} parent=23 // pred_check
          %p322 = pneg %p177
        $region38: #{tpu_custom_call.1} parent=23 // pred_check_branch
          %324 = sbr.rel (%p322) target = $region40
        $region39: #{tpu_custom_call.1} parent=23 // pred_region
          %p325 = scmp.lt.s32.totalorder %s24, 1
          %s326 = scalar_select %p325, %s24, 1
          %p327 = scmp.lt.s32.totalorder %s25, 0
          %s328 = scalar_select %p327, %s25, 0
          %s329 = sadd.s32 %s328, %s326
          %s330 = smul.addr %s329, 4
          %s331 = scalar_lea.vmem %s5, %s330
        $region40: #{tpu_custom_call.1} parent=23 // pred_fallthru
          _
        // Predicated region
        $region41: #{tpu_custom_call.1} parent=23 // pred_check
          %p332 = pneg %p205
        $region42: #{tpu_custom_call.1} parent=23 // pred_check_branch
          %334 = sbr.rel (%p332) target = $region44
        $region43: #{tpu_custom_call.1} parent=23 // pred_region
          %p335 = scmp.lt.s32.totalorder %s24, 1
          %s336 = scalar_select %p335, %s24, 1
          %p337 = scmp.lt.s32.totalorder %s25, 0
          %s338 = scalar_select %p337, %s25, 0
          %s339 = sadd.s32 %s338, %s336
          %s340 = smul.addr %s339, 4
          %s341 = scalar_lea.vmem %s6, %s340
        $region44: #{tpu_custom_call.1} parent=23 // pred_fallthru
          _
        // Predicated region
        $region45: #{tpu_custom_call.1} parent=23 // pred_check
          %p342 = pneg %p233
        $region46: #{tpu_custom_call.1} parent=23 // pred_check_branch
          %344 = sbr.rel (%p342) target = $region48
        $region47: #{tpu_custom_call.1} parent=23 // pred_region
          %p345 = scmp.lt.s32.totalorder %s24, 1
          %s346 = scalar_select %p345, %s24, 1
          %p347 = scmp.lt.s32.totalorder %s25, 0
          %s348 = scalar_select %p347, %s25, 0
          %s349 = sadd.s32 %s348, %s346
          %s350 = smul.addr %s349, 4
          %s351 = scalar_lea.vmem %s7, %s350
        $region48: #{tpu_custom_call.1} parent=23 // pred_fallthru
          _
      $region24: #{tpu_custom_call.1} parent=5 // pred_fallthru
        _
      %p352 = scmp.le.s32.totalorder 1, %s17
      %p353 = scmp.lt.s32.totalorder %s17, 3
      %p354 = pnand %p352, %p353
      %p355 = pneg %p354
      // Predicated region
      $region49: #{tpu_custom_call.1} parent=5 // pred_check
        _
      $region50: #{tpu_custom_call.1} parent=5 // pred_check_branch
        %357 = sbr.rel (%p354) target = $region52
      $region51: #{tpu_custom_call.1} parent=5 // pred_region
        %s358 = ssub.s32 %s17, 1
        %p359 = pneg %p50
        %p360 = pneg %p47
        %p361 = pneg %p71
        %p362 = pneg %p68
        %p363 = scmp.lt.s32.totalorder %s26, 1
        %s364 = scalar_select %p363, %s26, 1
        %p365 = scmp.lt.s32.totalorder %s27, 0
        %s366 = scalar_select %p365, %s27, 0
        %s367 = sadd.s32 %s366, %s364
        %s368 = smul.addr %s367, 4
        %s369 = scalar_lea.vmem %s2, %s368
        %p370 = pneg %p99
        %p371 = pneg %p96
        %p372 = scmp.lt.s32.totalorder %s26, 1
        %s373 = scalar_select %p372, %s26, 1
        %p374 = scmp.lt.s32.totalorder %s27, 0
        %s375 = scalar_select %p374, %s27, 0
        %s376 = sadd.s32 %s375, %s373
        %s377 = smul.addr %s376, 4
        %s378 = scalar_lea.vmem %s3, %s377
        %p379 = pneg %p127
        %p380 = pneg %p124
        %p381 = scmp.lt.s32.totalorder %s26, 1
        %s382 = scalar_select %p381, %s26, 1
        %p383 = scmp.lt.s32.totalorder %s27, 0
        %s384 = scalar_select %p383, %s27, 0
        %s385 = sadd.s32 %s384, %s382
        %s386 = smul.addr %s385, 4
        %s387 = scalar_lea.vmem %s4, %s386
        %p388 = pneg %p155
        %p389 = pneg %p152
        %p390 = scmp.lt.s32.totalorder %s26, 1
        %s391 = scalar_select %p390, %s26, 1
        %p392 = scmp.lt.s32.totalorder %s27, 0
        %s393 = scalar_select %p392, %s27, 0
        %s394 = sadd.s32 %s393, %s391
        %s395 = smul.addr %s394, 4
        %s396 = scalar_lea.vmem %s5, %s395
        %p397 = pneg %p183
        %p398 = pneg %p180
        %p399 = scmp.lt.s32.totalorder %s26, 1
        %s400 = scalar_select %p399, %s26, 1
        %p401 = scmp.lt.s32.totalorder %s27, 0
        %s402 = scalar_select %p401, %s27, 0
        %s403 = sadd.s32 %s402, %s400
        %s404 = smul.addr %s403, 4
        %s405 = scalar_lea.vmem %s6, %s404
        %p406 = pneg %p211
        %p407 = pneg %p208
        %p408 = scmp.lt.s32.totalorder %s26, 1
        %s409 = scalar_select %p408, %s26, 1
        %p410 = scmp.lt.s32.totalorder %s27, 0
        %s411 = scalar_select %p410, %s27, 0
        %s412 = sadd.s32 %s411, %s409
        %s413 = smul.addr %s412, 4
        %s414 = scalar_lea.vmem %s7, %s413
        %p415 = pneg %p239
        %p416 = pneg %p236
        %p417 = pneg %p267
        %p418 = pneg %p264
        %s419 = sand.u32 %s254, 1
        %s420 = scalar_lea.sflag [#allocation3], %s419
        %s421 = sand.u32 %s254, 1
        %s422 = smul.addr %s421, 8
        %s423 = scalar_lea.vmem [#allocation2], %s422
        %p424 = scmp.lt.s32.totalorder %s26, 1
        %s425 = scalar_select %p424, %s26, 1
        %p426 = scmp.lt.s32.totalorder %s27, 0
        %s427 = scalar_select %p426, %s27, 0
        %s428 = sadd.s32 %s427, %s425
        %s429 = smul.addr %s428, 4
        %s430 = scalar_lea.vmem %s2, %s429
        %p431 = scmp.lt.s32.totalorder %s26, 1
        %s432 = scalar_select %p431, %s26, 1
        %p433 = scmp.lt.s32.totalorder %s27, 0
        %s434 = scalar_select %p433, %s27, 0
        %s435 = sadd.s32 %s434, %s432
        %s436 = smul.addr %s435, 4
        %s437 = scalar_lea.vmem %s3, %s436
        %p438 = scmp.lt.s32.totalorder %s26, 1
        %s439 = scalar_select %p438, %s26, 1
        %p440 = scmp.lt.s32.totalorder %s27, 0
        %s441 = scalar_select %p440, %s27, 0
        %s442 = sadd.s32 %s441, %s439
        %s443 = smul.addr %s442, 4
        %s444 = scalar_lea.vmem %s4, %s443
        %p445 = scmp.lt.s32.totalorder %s26, 1
        %s446 = scalar_select %p445, %s26, 1
        %p447 = scmp.lt.s32.totalorder %s27, 0
        %s448 = scalar_select %p447, %s27, 0
        %s449 = sadd.s32 %s448, %s446
        %s450 = smul.addr %s449, 4
        %s451 = scalar_lea.vmem %s5, %s450
        %p452 = scmp.lt.s32.totalorder %s26, 1
        %s453 = scalar_select %p452, %s26, 1
        %p454 = scmp.lt.s32.totalorder %s27, 0
        %s455 = scalar_select %p454, %s27, 0
        %s456 = sadd.s32 %s455, %s453
        %s457 = smul.addr %s456, 4
        %s458 = scalar_lea.vmem %s6, %s457
        %p459 = scmp.lt.s32.totalorder %s26, 1
        %s460 = scalar_select %p459, %s26, 1
        %p461 = scmp.lt.s32.totalorder %s27, 0
        %s462 = scalar_select %p461, %s27, 0
        %s463 = sadd.s32 %s462, %s460
        %s464 = smul.addr %s463, 4
        %s465 = scalar_lea.vmem %s7, %s464
        %v466 = vld [vmem:[%s430] sm:$0xf]
        %v467 = vld [vmem:[%s437] sm:$0xf]
        %v468 = vld [vmem:[%s444] sm:$0xf]
        %v469 = vld [vmem:[%s451] sm:$0xf]
        %v470 = vld [vmem:[%s458] sm:$0xf]
        %v471 = vld [vmem:[%s465] sm:$0xf]
        %v472 = vlaneseq
        %v473 = vand.u32 %v472, 127
        %vm474 = vcmp.lt.s32.totalorder %v473, 0
        %v475 = vsub.s32 0, %v473
        %v476 = vsel %vm474, %v475, %v473
        %v477 = vshrl.u32 %v476, 3
        %v478 = vand.u32 %v476, 7
        %v479 = vsub.s32 0, %v478
        %v480 = vsel %vm474, %v479, %v478
        %vm481 = vcmp.ne.s32.totalorder %v480, 0
        %vm482 = vcmp.lt.s32.totalorder %v480, 0
        %vm483 = vmand %vm482, %vm481
        %v484 = vadd.s32 %v480, 8
        %v485 = vsel %vm483, %v484, %v480
        %vm486 = vcmp.ne.s32.totalorder %v485, 0
        %s487 = scalar_lea.vmem %s0, 32
        %v488 = vld [vmem:[%s487] sm:$0xff]
        %s489 = scalar_lea.vmem %s0, 40
        %v490 = vld [vmem:[%s489] sm:$0xff]
        %vm491 = vcmask 31744
        %v493 = vsel %vm491, %v490, 0
        %vm495 = vcmask 1043456
        %v497 = vsel %vm495, %v467, 0
        %499 = vmatpush.msra.mxu0 0.0
        %500 = vmatpush.msra.mxu0 0.0
        %501 = vmatpush.msra.mxu0 0.0
        %502 = vmatpush.msra.mxu0 0.0
        %503 = vmatpush.msra.mxu0 0.0
        %504 = vmatpush.msra.mxu0 0.0
        %505 = vmatpush.msra.mxu0 0.0
        %506 = vmatpush.msra.mxu0 0.0
        %507 = vmatpush.msra.mxu0 0.0
        %508 = vmatpush.msra.mxu0 0.0
        %509 = vmatpush.msra.mxu0 0.0
        %510 = vmatpush.msra.mxu0 0.0
        %511 = vmatpush.msra.mxu0 0.0
        %512 = vmatpush.msra.mxu0 0.0
        %513 = vmatpush.msra.mxu0 0.0
        %v514 = vand.u32 %v497, 4294901760
        %515 = vmatpush.msra.mxu0 %v514
        %v516 = vand.u32 %v493, 4294901760
        %v517 = vsub.f32 %v493, %v516
        %v518 = vand.u32 %v517, 4294901760
        %v519 = vsub.f32 %v517, %v518
        %v520 = vand.u32 %v519, 4294901760
        %521 = vmatmul.f32.gmra.mxu0 %v520
        %v522 = vpop.f32.mrf.mxu0
        %v523 = vadd.f32 0.0, %v522
        %524 = vdwg.mxu0
        %525 = vmatpush.msra.mxu0 0.0
        %526 = vmatpush.msra.mxu0 0.0
        %527 = vmatpush.msra.mxu0 0.0
        %528 = vmatpush.msra.mxu0 0.0
        %529 = vmatpush.msra.mxu0 0.0
        %530 = vmatpush.msra.mxu0 0.0
        %531 = vmatpush.msra.mxu0 0.0
        %532 = vmatpush.msra.mxu0 0.0
        %533 = vmatpush.msra.mxu0 0.0
        %534 = vmatpush.msra.mxu0 0.0
        %535 = vmatpush.msra.mxu0 0.0
        %536 = vmatpush.msra.mxu0 0.0
        %537 = vmatpush.msra.mxu0 0.0
        %538 = vmatpush.msra.mxu0 0.0
        %539 = vmatpush.msra.mxu0 0.0
        %v540 = vand.u32 %v497, 4294901760
        %v541 = vsub.f32 %v497, %v540
        %v542 = vand.u32 %v541, 4294901760
        %v543 = vsub.f32 %v541, %v542
        %v544 = vand.u32 %v543, 4294901760
        %545 = vmatpush.msra.mxu0 %v544
        %v546 = vand.u32 %v493, 4294901760
        %547 = vmatmul.f32.gmra.mxu0 %v546
        %v548 = vpop.f32.mrf.mxu0
        %v549 = vadd.f32 %v523, %v548
        %550 = vdwg.mxu0
        %551 = vmatpush.msra.mxu0 0.0
        %552 = vmatpush.msra.mxu0 0.0
        %553 = vmatpush.msra.mxu0 0.0
        %554 = vmatpush.msra.mxu0 0.0
        %555 = vmatpush.msra.mxu0 0.0
        %556 = vmatpush.msra.mxu0 0.0
        %557 = vmatpush.msra.mxu0 0.0
        %558 = vmatpush.msra.mxu0 0.0
        %559 = vmatpush.msra.mxu0 0.0
        %560 = vmatpush.msra.mxu0 0.0
        %561 = vmatpush.msra.mxu0 0.0
        %562 = vmatpush.msra.mxu0 0.0
        %563 = vmatpush.msra.mxu0 0.0
        %564 = vmatpush.msra.mxu0 0.0
        %565 = vmatpush.msra.mxu0 0.0
        %v566 = vand.u32 %v497, 4294901760
        %v567 = vsub.f32 %v497, %v566
        %568 = vmatpush.msra.mxu0 %v567
        %v569 = vand.u32 %v493, 4294901760
        %v570 = vsub.f32 %v493, %v569
        %571 = vmatmul.f32.gmra.mxu0 %v570
        %v572 = vpop.f32.mrf.mxu0
        %v573 = vadd.f32 %v549, %v572
        %574 = vdwg.mxu0
        %575 = vmatpush.msra.mxu0 0.0
        %576 = vmatpush.msra.mxu0 0.0
        %577 = vmatpush.msra.mxu0 0.0
        %578 = vmatpush.msra.mxu0 0.0
        %579 = vmatpush.msra.mxu0 0.0
        %580 = vmatpush.msra.mxu0 0.0
        %581 = vmatpush.msra.mxu0 0.0
        %582 = vmatpush.msra.mxu0 0.0
        %583 = vmatpush.msra.mxu0 0.0
        %584 = vmatpush.msra.mxu0 0.0
        %585 = vmatpush.msra.mxu0 0.0
        %586 = vmatpush.msra.mxu0 0.0
        %587 = vmatpush.msra.mxu0 0.0
        %588 = vmatpush.msra.mxu0 0.0
        %589 = vmatpush.msra.mxu0 0.0
        %v590 = vand.u32 %v497, 4294901760
        %591 = vmatpush.msra.mxu0 %v590
        %v592 = vand.u32 %v493, 4294901760
        %v593 = vsub.f32 %v493, %v592
        %v594 = vand.u32 %v593, 4294901760
        %595 = vmatmul.f32.gmra.mxu0 %v594
        %v596 = vpop.f32.mrf.mxu0
        %v597 = vadd.f32 %v573, %v596
        %598 = vdwg.mxu0
        %599 = vmatpush.msra.mxu0 0.0
        %600 = vmatpush.msra.mxu0 0.0
        %601 = vmatpush.msra.mxu0 0.0
        %602 = vmatpush.msra.mxu0 0.0
        %603 = vmatpush.msra.mxu0 0.0
        %604 = vmatpush.msra.mxu0 0.0
        %605 = vmatpush.msra.mxu0 0.0
        %606 = vmatpush.msra.mxu0 0.0
        %607 = vmatpush.msra.mxu0 0.0
        %608 = vmatpush.msra.mxu0 0.0
        %609 = vmatpush.msra.mxu0 0.0
        %610 = vmatpush.msra.mxu0 0.0
        %611 = vmatpush.msra.mxu0 0.0
        %612 = vmatpush.msra.mxu0 0.0
        %613 = vmatpush.msra.mxu0 0.0
        %v614 = vand.u32 %v497, 4294901760
        %v615 = vsub.f32 %v497, %v614
        %v616 = vand.u32 %v615, 4294901760
        %617 = vmatpush.msra.mxu0 %v616
        %v618 = vand.u32 %v493, 4294901760
        %619 = vmatmul.f32.gmra.mxu0 %v618
        %v620 = vpop.f32.mrf.mxu0
        %v621 = vadd.f32 %v597, %v620
        %622 = vdwg.mxu0
        %623 = vmatpush.msra.mxu0 0.0
        %624 = vmatpush.msra.mxu0 0.0
        %625 = vmatpush.msra.mxu0 0.0
        %626 = vmatpush.msra.mxu0 0.0
        %627 = vmatpush.msra.mxu0 0.0
        %628 = vmatpush.msra.mxu0 0.0
        %629 = vmatpush.msra.mxu0 0.0
        %630 = vmatpush.msra.mxu0 0.0
        %631 = vmatpush.msra.mxu0 0.0
        %632 = vmatpush.msra.mxu0 0.0
        %633 = vmatpush.msra.mxu0 0.0
        %634 = vmatpush.msra.mxu0 0.0
        %635 = vmatpush.msra.mxu0 0.0
        %636 = vmatpush.msra.mxu0 0.0
        %637 = vmatpush.msra.mxu0 0.0
        %v638 = vand.u32 %v497, 4294901760
        %639 = vmatpush.msra.mxu0 %v638
        %v640 = vand.u32 %v493, 4294901760
        %641 = vmatmul.f32.gmra.mxu0 %v640
        %v642 = vpop.f32.mrf.mxu0
        %v643 = vadd.f32 %v621, %v642
        %644 = vdwg.mxu0
        %v646 = vsel %vm491, %v488, 0
        %v649 = vsel %vm495, %v466, 0
        %651 = vmatpush.msra.mxu0 0.0
        %652 = vmatpush.msra.mxu0 0.0
        %653 = vmatpush.msra.mxu0 0.0
        %654 = vmatpush.msra.mxu0 0.0
        %655 = vmatpush.msra.mxu0 0.0
        %656 = vmatpush.msra.mxu0 0.0
        %657 = vmatpush.msra.mxu0 0.0
        %658 = vmatpush.msra.mxu0 0.0
        %659 = vmatpush.msra.mxu0 0.0
        %660 = vmatpush.msra.mxu0 0.0
        %661 = vmatpush.msra.mxu0 0.0
        %662 = vmatpush.msra.mxu0 0.0
        %663 = vmatpush.msra.mxu0 0.0
        %664 = vmatpush.msra.mxu0 0.0
        %665 = vmatpush.msra.mxu0 0.0
        %v666 = vand.u32 %v649, 4294901760
        %667 = vmatpush.msra.mxu0 %v666
        %v668 = vand.u32 %v646, 4294901760
        %v669 = vsub.f32 %v646, %v668
        %v670 = vand.u32 %v669, 4294901760
        %v671 = vsub.f32 %v669, %v670
        %v672 = vand.u32 %v671, 4294901760
        %673 = vmatmul.f32.gmra.mxu0 %v672
        %v674 = vpop.f32.mrf.mxu0
        %v675 = vadd.f32 %v643, %v674
        %676 = vdwg.mxu0
        %677 = vmatpush.msra.mxu0 0.0
        %678 = vmatpush.msra.mxu0 0.0
        %679 = vmatpush.msra.mxu0 0.0
        %680 = vmatpush.msra.mxu0 0.0
        %681 = vmatpush.msra.mxu0 0.0
        %682 = vmatpush.msra.mxu0 0.0
        %683 = vmatpush.msra.mxu0 0.0
        %684 = vmatpush.msra.mxu0 0.0
        %685 = vmatpush.msra.mxu0 0.0
        %686 = vmatpush.msra.mxu0 0.0
        %687 = vmatpush.msra.mxu0 0.0
        %688 = vmatpush.msra.mxu0 0.0
        %689 = vmatpush.msra.mxu0 0.0
        %690 = vmatpush.msra.mxu0 0.0
        %691 = vmatpush.msra.mxu0 0.0
        %v692 = vand.u32 %v649, 4294901760
        %v693 = vsub.f32 %v649, %v692
        %v694 = vand.u32 %v693, 4294901760
        %v695 = vsub.f32 %v693, %v694
        %v696 = vand.u32 %v695, 4294901760
        %697 = vmatpush.msra.mxu0 %v696
        %v698 = vand.u32 %v646, 4294901760
        %699 = vmatmul.f32.gmra.mxu0 %v698
        %v700 = vpop.f32.mrf.mxu0
        %v701 = vadd.f32 %v675, %v700
        %702 = vdwg.mxu0
        %703 = vmatpush.msra.mxu0 0.0
        %704 = vmatpush.msra.mxu0 0.0
        %705 = vmatpush.msra.mxu0 0.0
        %706 = vmatpush.msra.mxu0 0.0
        %707 = vmatpush.msra.mxu0 0.0
        %708 = vmatpush.msra.mxu0 0.0
        %709 = vmatpush.msra.mxu0 0.0
        %710 = vmatpush.msra.mxu0 0.0
        %711 = vmatpush.msra.mxu0 0.0
        %712 = vmatpush.msra.mxu0 0.0
        %713 = vmatpush.msra.mxu0 0.0
        %714 = vmatpush.msra.mxu0 0.0
        %715 = vmatpush.msra.mxu0 0.0
        %716 = vmatpush.msra.mxu0 0.0
        %717 = vmatpush.msra.mxu0 0.0
        %v718 = vand.u32 %v649, 4294901760
        %v719 = vsub.f32 %v649, %v718
        %720 = vmatpush.msra.mxu0 %v719
        %v721 = vand.u32 %v646, 4294901760
        %v722 = vsub.f32 %v646, %v721
        %723 = vmatmul.f32.gmra.mxu0 %v722
        %v724 = vpop.f32.mrf.mxu0
        %v725 = vadd.f32 %v701, %v724
        %726 = vdwg.mxu0
        %727 = vmatpush.msra.mxu0 0.0
        %728 = vmatpush.msra.mxu0 0.0
        %729 = vmatpush.msra.mxu0 0.0
        %730 = vmatpush.msra.mxu0 0.0
        %731 = vmatpush.msra.mxu0 0.0
        %732 = vmatpush.msra.mxu0 0.0
        %733 = vmatpush.msra.mxu0 0.0
        %734 = vmatpush.msra.mxu0 0.0
        %735 = vmatpush.msra.mxu0 0.0
        %736 = vmatpush.msra.mxu0 0.0
        %737 = vmatpush.msra.mxu0 0.0
        %738 = vmatpush.msra.mxu0 0.0
        %739 = vmatpush.msra.mxu0 0.0
        %740 = vmatpush.msra.mxu0 0.0
        %741 = vmatpush.msra.mxu0 0.0
        %v742 = vand.u32 %v649, 4294901760
        %743 = vmatpush.msra.mxu0 %v742
        %v744 = vand.u32 %v646, 4294901760
        %v745 = vsub.f32 %v646, %v744
        %v746 = vand.u32 %v745, 4294901760
        %747 = vmatmul.f32.gmra.mxu0 %v746
        %v748 = vpop.f32.mrf.mxu0
        %v749 = vadd.f32 %v725, %v748
        %750 = vdwg.mxu0
        %751 = vmatpush.msra.mxu0 0.0
        %752 = vmatpush.msra.mxu0 0.0
        %753 = vmatpush.msra.mxu0 0.0
        %754 = vmatpush.msra.mxu0 0.0
        %755 = vmatpush.msra.mxu0 0.0
        %756 = vmatpush.msra.mxu0 0.0
        %757 = vmatpush.msra.mxu0 0.0
        %758 = vmatpush.msra.mxu0 0.0
        %759 = vmatpush.msra.mxu0 0.0
        %760 = vmatpush.msra.mxu0 0.0
        %761 = vmatpush.msra.mxu0 0.0
        %762 = vmatpush.msra.mxu0 0.0
        %763 = vmatpush.msra.mxu0 0.0
        %764 = vmatpush.msra.mxu0 0.0
        %765 = vmatpush.msra.mxu0 0.0
        %v766 = vand.u32 %v649, 4294901760
        %v767 = vsub.f32 %v649, %v766
        %v768 = vand.u32 %v767, 4294901760
        %769 = vmatpush.msra.mxu0 %v768
        %v770 = vand.u32 %v646, 4294901760
        %771 = vmatmul.f32.gmra.mxu0 %v770
        %v772 = vpop.f32.mrf.mxu0
        %v773 = vadd.f32 %v749, %v772
        %774 = vdwg.mxu0
        %775 = vmatpush.msra.mxu0 0.0
        %776 = vmatpush.msra.mxu0 0.0
        %777 = vmatpush.msra.mxu0 0.0
        %778 = vmatpush.msra.mxu0 0.0
        %779 = vmatpush.msra.mxu0 0.0
        %780 = vmatpush.msra.mxu0 0.0
        %781 = vmatpush.msra.mxu0 0.0
        %782 = vmatpush.msra.mxu0 0.0
        %783 = vmatpush.msra.mxu0 0.0
        %784 = vmatpush.msra.mxu0 0.0
        %785 = vmatpush.msra.mxu0 0.0
        %786 = vmatpush.msra.mxu0 0.0
        %787 = vmatpush.msra.mxu0 0.0
        %788 = vmatpush.msra.mxu0 0.0
        %789 = vmatpush.msra.mxu0 0.0
        %v790 = vand.u32 %v649, 4294901760
        %791 = vmatpush.msra.mxu0 %v790
        %v792 = vand.u32 %v646, 4294901760
        %793 = vmatmul.f32.gmra.mxu0 %v792
        %v794 = vpop.f32.mrf.mxu0
        %v795 = vadd.f32 %v773, %v794
        %796 = vdwg.mxu0
        %797 = vrot.lane.b32.xlu0 %v467, 1
        %v798 = vpop.permute.xlu0 %797
        %vm800 = vcmask 7168
        %v801 = vsel %vm800, 0.0, %v798
        %v802 = vsel %vm486, 1, 0
        %vm803 = vcmp.eq.s32.totalorder %v802, 1
        %v804 = vsel %vm803, %v801, 0.0
        %s805 = scalar_lea.vmem %s0, 24
        %v806 = vld [vmem:[%s805] sm:$0xff]
        %v808 = vsel %vm491, %v806, 0
        %v811 = vsel %vm495, %v804, 0
        %813 = vmatpush.msra.mxu0 0.0
        %814 = vmatpush.msra.mxu0 0.0
        %815 = vmatpush.msra.mxu0 0.0
        %816 = vmatpush.msra.mxu0 0.0
        %817 = vmatpush.msra.mxu0 0.0
        %818 = vmatpush.msra.mxu0 0.0
        %819 = vmatpush.msra.mxu0 0.0
        %820 = vmatpush.msra.mxu0 0.0
        %821 = vmatpush.msra.mxu0 0.0
        %822 = vmatpush.msra.mxu0 0.0
        %823 = vmatpush.msra.mxu0 0.0
        %824 = vmatpush.msra.mxu0 0.0
        %825 = vmatpush.msra.mxu0 0.0
        %826 = vmatpush.msra.mxu0 0.0
        %827 = vmatpush.msra.mxu0 0.0
        %v828 = vand.u32 %v811, 4294901760
        %829 = vmatpush.msra.mxu0 %v828
        %v830 = vand.u32 %v808, 4294901760
        %v831 = vsub.f32 %v808, %v830
        %v832 = vand.u32 %v831, 4294901760
        %v833 = vsub.f32 %v831, %v832
        %v834 = vand.u32 %v833, 4294901760
        %835 = vmatmul.f32.gmra.mxu0 %v834
        %v836 = vpop.f32.mrf.mxu0
        %v837 = vadd.f32 0.0, %v836
        %838 = vdwg.mxu0
        %839 = vmatpush.msra.mxu0 0.0
        %840 = vmatpush.msra.mxu0 0.0
        %841 = vmatpush.msra.mxu0 0.0
        %842 = vmatpush.msra.mxu0 0.0
        %843 = vmatpush.msra.mxu0 0.0
        %844 = vmatpush.msra.mxu0 0.0
        %845 = vmatpush.msra.mxu0 0.0
        %846 = vmatpush.msra.mxu0 0.0
        %847 = vmatpush.msra.mxu0 0.0
        %848 = vmatpush.msra.mxu0 0.0
        %849 = vmatpush.msra.mxu0 0.0
        %850 = vmatpush.msra.mxu0 0.0
        %851 = vmatpush.msra.mxu0 0.0
        %852 = vmatpush.msra.mxu0 0.0
        %853 = vmatpush.msra.mxu0 0.0
        %v854 = vand.u32 %v811, 4294901760
        %v855 = vsub.f32 %v811, %v854
        %v856 = vand.u32 %v855, 4294901760
        %v857 = vsub.f32 %v855, %v856
        %v858 = vand.u32 %v857, 4294901760
        %859 = vmatpush.msra.mxu0 %v858
        %v860 = vand.u32 %v808, 4294901760
        %861 = vmatmul.f32.gmra.mxu0 %v860
        %v862 = vpop.f32.mrf.mxu0
        %v863 = vadd.f32 %v837, %v862
        %864 = vdwg.mxu0
        %865 = vmatpush.msra.mxu0 0.0
        %866 = vmatpush.msra.mxu0 0.0
        %867 = vmatpush.msra.mxu0 0.0
        %868 = vmatpush.msra.mxu0 0.0
        %869 = vmatpush.msra.mxu0 0.0
        %870 = vmatpush.msra.mxu0 0.0
        %871 = vmatpush.msra.mxu0 0.0
        %872 = vmatpush.msra.mxu0 0.0
        %873 = vmatpush.msra.mxu0 0.0
        %874 = vmatpush.msra.mxu0 0.0
        %875 = vmatpush.msra.mxu0 0.0
        %876 = vmatpush.msra.mxu0 0.0
        %877 = vmatpush.msra.mxu0 0.0
        %878 = vmatpush.msra.mxu0 0.0
        %879 = vmatpush.msra.mxu0 0.0
        %v880 = vand.u32 %v811, 4294901760
        %v881 = vsub.f32 %v811, %v880
        %882 = vmatpush.msra.mxu0 %v881
        %v883 = vand.u32 %v808, 4294901760
        %v884 = vsub.f32 %v808, %v883
        %885 = vmatmul.f32.gmra.mxu0 %v884
        %v886 = vpop.f32.mrf.mxu0
        %v887 = vadd.f32 %v863, %v886
        %888 = vdwg.mxu0
        %889 = vmatpush.msra.mxu0 0.0
        %890 = vmatpush.msra.mxu0 0.0
        %891 = vmatpush.msra.mxu0 0.0
        %892 = vmatpush.msra.mxu0 0.0
        %893 = vmatpush.msra.mxu0 0.0
        %894 = vmatpush.msra.mxu0 0.0
        %895 = vmatpush.msra.mxu0 0.0
        %896 = vmatpush.msra.mxu0 0.0
        %897 = vmatpush.msra.mxu0 0.0
        %898 = vmatpush.msra.mxu0 0.0
        %899 = vmatpush.msra.mxu0 0.0
        %900 = vmatpush.msra.mxu0 0.0
        %901 = vmatpush.msra.mxu0 0.0
        %902 = vmatpush.msra.mxu0 0.0
        %903 = vmatpush.msra.mxu0 0.0
        %v904 = vand.u32 %v811, 4294901760
        %905 = vmatpush.msra.mxu0 %v904
        %v906 = vand.u32 %v808, 4294901760
        %v907 = vsub.f32 %v808, %v906
        %v908 = vand.u32 %v907, 4294901760
        %909 = vmatmul.f32.gmra.mxu0 %v908
        %v910 = vpop.f32.mrf.mxu0
        %v911 = vadd.f32 %v887, %v910
        %912 = vdwg.mxu0
        %913 = vmatpush.msra.mxu0 0.0
        %914 = vmatpush.msra.mxu0 0.0
        %915 = vmatpush.msra.mxu0 0.0
        %916 = vmatpush.msra.mxu0 0.0
        %917 = vmatpush.msra.mxu0 0.0
        %918 = vmatpush.msra.mxu0 0.0
        %919 = vmatpush.msra.mxu0 0.0
        %920 = vmatpush.msra.mxu0 0.0
        %921 = vmatpush.msra.mxu0 0.0
        %922 = vmatpush.msra.mxu0 0.0
        %923 = vmatpush.msra.mxu0 0.0
        %924 = vmatpush.msra.mxu0 0.0
        %925 = vmatpush.msra.mxu0 0.0
        %926 = vmatpush.msra.mxu0 0.0
        %927 = vmatpush.msra.mxu0 0.0
        %v928 = vand.u32 %v811, 4294901760
        %v929 = vsub.f32 %v811, %v928
        %v930 = vand.u32 %v929, 4294901760
        %931 = vmatpush.msra.mxu0 %v930
        %v932 = vand.u32 %v808, 4294901760
        %933 = vmatmul.f32.gmra.mxu0 %v932
        %v934 = vpop.f32.mrf.mxu0
        %v935 = vadd.f32 %v911, %v934
        %936 = vdwg.mxu0
        %937 = vmatpush.msra.mxu0 0.0
        %938 = vmatpush.msra.mxu0 0.0
        %939 = vmatpush.msra.mxu0 0.0
        %940 = vmatpush.msra.mxu0 0.0
        %941 = vmatpush.msra.mxu0 0.0
        %942 = vmatpush.msra.mxu0 0.0
        %943 = vmatpush.msra.mxu0 0.0
        %944 = vmatpush.msra.mxu0 0.0
        %945 = vmatpush.msra.mxu0 0.0
        %946 = vmatpush.msra.mxu0 0.0
        %947 = vmatpush.msra.mxu0 0.0
        %948 = vmatpush.msra.mxu0 0.0
        %949 = vmatpush.msra.mxu0 0.0
        %950 = vmatpush.msra.mxu0 0.0
        %951 = vmatpush.msra.mxu0 0.0
        %v952 = vand.u32 %v811, 4294901760
        %953 = vmatpush.msra.mxu0 %v952
        %v954 = vand.u32 %v808, 4294901760
        %955 = vmatmul.f32.gmra.mxu0 %v954
        %v956 = vpop.f32.mrf.mxu0
        %v957 = vadd.f32 %v935, %v956
        %958 = vdwg.mxu0
        %v959 = vadd.f32 %v795, %v957
        %s960 = scalar_lea.vmem %s0, 56
        %v961 = vld [vmem:[%s960] sm:$0xff]
        %v963 = vsel %vm491, %v961, 0
        %v966 = vsel %vm495, %v468, 0
        %968 = vmatpush.msra.mxu0 0.0
        %969 = vmatpush.msra.mxu0 0.0
        %970 = vmatpush.msra.mxu0 0.0
        %971 = vmatpush.msra.mxu0 0.0
        %972 = vmatpush.msra.mxu0 0.0
        %973 = vmatpush.msra.mxu0 0.0
        %974 = vmatpush.msra.mxu0 0.0
        %975 = vmatpush.msra.mxu0 0.0
        %976 = vmatpush.msra.mxu0 0.0
        %977 = vmatpush.msra.mxu0 0.0
        %978 = vmatpush.msra.mxu0 0.0
        %979 = vmatpush.msra.mxu0 0.0
        %980 = vmatpush.msra.mxu0 0.0
        %981 = vmatpush.msra.mxu0 0.0
        %982 = vmatpush.msra.mxu0 0.0
        %v983 = vand.u32 %v966, 4294901760
        %984 = vmatpush.msra.mxu0 %v983
        %v985 = vand.u32 %v963, 4294901760
        %v986 = vsub.f32 %v963, %v985
        %v987 = vand.u32 %v986, 4294901760
        %v988 = vsub.f32 %v986, %v987
        %v989 = vand.u32 %v988, 4294901760
        %990 = vmatmul.f32.gmra.mxu0 %v989
        %v991 = vpop.f32.mrf.mxu0
        %v992 = vadd.f32 0.0, %v991
        %993 = vdwg.mxu0
        %994 = vmatpush.msra.mxu0 0.0
        %995 = vmatpush.msra.mxu0 0.0
        %996 = vmatpush.msra.mxu0 0.0
        %997 = vmatpush.msra.mxu0 0.0
        %998 = vmatpush.msra.mxu0 0.0
        %999 = vmatpush.msra.mxu0 0.0
        %1000 = vmatpush.msra.mxu0 0.0
        %1001 = vmatpush.msra.mxu0 0.0
        %1002 = vmatpush.msra.mxu0 0.0
        %1003 = vmatpush.msra.mxu0 0.0
        %1004 = vmatpush.msra.mxu0 0.0
        %1005 = vmatpush.msra.mxu0 0.0
        %1006 = vmatpush.msra.mxu0 0.0
        %1007 = vmatpush.msra.mxu0 0.0
        %1008 = vmatpush.msra.mxu0 0.0
        %v1009 = vand.u32 %v966, 4294901760
        %v1010 = vsub.f32 %v966, %v1009
        %v1011 = vand.u32 %v1010, 4294901760
        %v1012 = vsub.f32 %v1010, %v1011
        %v1013 = vand.u32 %v1012, 4294901760
        %1014 = vmatpush.msra.mxu0 %v1013
        %v1015 = vand.u32 %v963, 4294901760
        %1016 = vmatmul.f32.gmra.mxu0 %v1015
        %v1017 = vpop.f32.mrf.mxu0
        %v1018 = vadd.f32 %v992, %v1017
        %1019 = vdwg.mxu0
        %1020 = vmatpush.msra.mxu0 0.0
        %1021 = vmatpush.msra.mxu0 0.0
        %1022 = vmatpush.msra.mxu0 0.0
        %1023 = vmatpush.msra.mxu0 0.0
        %1024 = vmatpush.msra.mxu0 0.0
        %1025 = vmatpush.msra.mxu0 0.0
        %1026 = vmatpush.msra.mxu0 0.0
        %1027 = vmatpush.msra.mxu0 0.0
        %1028 = vmatpush.msra.mxu0 0.0
        %1029 = vmatpush.msra.mxu0 0.0
        %1030 = vmatpush.msra.mxu0 0.0
        %1031 = vmatpush.msra.mxu0 0.0
        %1032 = vmatpush.msra.mxu0 0.0
        %1033 = vmatpush.msra.mxu0 0.0
        %1034 = vmatpush.msra.mxu0 0.0
        %v1035 = vand.u32 %v966, 4294901760
        %v1036 = vsub.f32 %v966, %v1035
        %1037 = vmatpush.msra.mxu0 %v1036
        %v1038 = vand.u32 %v963, 4294901760
        %v1039 = vsub.f32 %v963, %v1038
        %1040 = vmatmul.f32.gmra.mxu0 %v1039
        %v1041 = vpop.f32.mrf.mxu0
        %v1042 = vadd.f32 %v1018, %v1041
        %1043 = vdwg.mxu0
        %1044 = vmatpush.msra.mxu0 0.0
        %1045 = vmatpush.msra.mxu0 0.0
        %1046 = vmatpush.msra.mxu0 0.0
        %1047 = vmatpush.msra.mxu0 0.0
        %1048 = vmatpush.msra.mxu0 0.0
        %1049 = vmatpush.msra.mxu0 0.0
        %1050 = vmatpush.msra.mxu0 0.0
        %1051 = vmatpush.msra.mxu0 0.0
        %1052 = vmatpush.msra.mxu0 0.0
        %1053 = vmatpush.msra.mxu0 0.0
        %1054 = vmatpush.msra.mxu0 0.0
        %1055 = vmatpush.msra.mxu0 0.0
        %1056 = vmatpush.msra.mxu0 0.0
        %1057 = vmatpush.msra.mxu0 0.0
        %1058 = vmatpush.msra.mxu0 0.0
        %v1059 = vand.u32 %v966, 4294901760
        %1060 = vmatpush.msra.mxu0 %v1059
        %v1061 = vand.u32 %v963, 4294901760
        %v1062 = vsub.f32 %v963, %v1061
        %v1063 = vand.u32 %v1062, 4294901760
        %1064 = vmatmul.f32.gmra.mxu0 %v1063
        %v1065 = vpop.f32.mrf.mxu0
        %v1066 = vadd.f32 %v1042, %v1065
        %1067 = vdwg.mxu0
        %1068 = vmatpush.msra.mxu0 0.0
        %1069 = vmatpush.msra.mxu0 0.0
        %1070 = vmatpush.msra.mxu0 0.0
        %1071 = vmatpush.msra.mxu0 0.0
        %1072 = vmatpush.msra.mxu0 0.0
        %1073 = vmatpush.msra.mxu0 0.0
        %1074 = vmatpush.msra.mxu0 0.0
        %1075 = vmatpush.msra.mxu0 0.0
        %1076 = vmatpush.msra.mxu0 0.0
        %1077 = vmatpush.msra.mxu0 0.0
        %1078 = vmatpush.msra.mxu0 0.0
        %1079 = vmatpush.msra.mxu0 0.0
        %1080 = vmatpush.msra.mxu0 0.0
        %1081 = vmatpush.msra.mxu0 0.0
        %1082 = vmatpush.msra.mxu0 0.0
        %v1083 = vand.u32 %v966, 4294901760
        %v1084 = vsub.f32 %v966, %v1083
        %v1085 = vand.u32 %v1084, 4294901760
        %1086 = vmatpush.msra.mxu0 %v1085
        %v1087 = vand.u32 %v963, 4294901760
        %1088 = vmatmul.f32.gmra.mxu0 %v1087
        %v1089 = vpop.f32.mrf.mxu0
        %v1090 = vadd.f32 %v1066, %v1089
        %1091 = vdwg.mxu0
        %1092 = vmatpush.msra.mxu0 0.0
        %1093 = vmatpush.msra.mxu0 0.0
        %1094 = vmatpush.msra.mxu0 0.0
        %1095 = vmatpush.msra.mxu0 0.0
        %1096 = vmatpush.msra.mxu0 0.0
        %1097 = vmatpush.msra.mxu0 0.0
        %1098 = vmatpush.msra.mxu0 0.0
        %1099 = vmatpush.msra.mxu0 0.0
        %1100 = vmatpush.msra.mxu0 0.0
        %1101 = vmatpush.msra.mxu0 0.0
        %1102 = vmatpush.msra.mxu0 0.0
        %1103 = vmatpush.msra.mxu0 0.0
        %1104 = vmatpush.msra.mxu0 0.0
        %1105 = vmatpush.msra.mxu0 0.0
        %1106 = vmatpush.msra.mxu0 0.0
        %v1107 = vand.u32 %v966, 4294901760
        %1108 = vmatpush.msra.mxu0 %v1107
        %v1109 = vand.u32 %v963, 4294901760
        %1110 = vmatmul.f32.gmra.mxu0 %v1109
        %v1111 = vpop.f32.mrf.mxu0
        %v1112 = vadd.f32 %v1090, %v1111
        %1113 = vdwg.mxu0
        %v1114 = vadd.f32 %v959, %v1112
        %s1115 = scalar_lea.vmem %s0, 8
        %v1116 = vld [vmem:[%s1115] sm:$0xff]
        %v1118 = vsel %vm491, %v1116, 0
        %v1121 = vsel %vm495, %v470, 0
        %1123 = vmatpush.msra.mxu0 0.0
        %1124 = vmatpush.msra.mxu0 0.0
        %1125 = vmatpush.msra.mxu0 0.0
        %1126 = vmatpush.msra.mxu0 0.0
        %1127 = vmatpush.msra.mxu0 0.0
        %1128 = vmatpush.msra.mxu0 0.0
        %1129 = vmatpush.msra.mxu0 0.0
        %1130 = vmatpush.msra.mxu0 0.0
        %1131 = vmatpush.msra.mxu0 0.0
        %1132 = vmatpush.msra.mxu0 0.0
        %1133 = vmatpush.msra.mxu0 0.0
        %1134 = vmatpush.msra.mxu0 0.0
        %1135 = vmatpush.msra.mxu0 0.0
        %1136 = vmatpush.msra.mxu0 0.0
        %1137 = vmatpush.msra.mxu0 0.0
        %v1138 = vand.u32 %v1121, 4294901760
        %1139 = vmatpush.msra.mxu0 %v1138
        %v1140 = vand.u32 %v1118, 4294901760
        %v1141 = vsub.f32 %v1118, %v1140
        %v1142 = vand.u32 %v1141, 4294901760
        %v1143 = vsub.f32 %v1141, %v1142
        %v1144 = vand.u32 %v1143, 4294901760
        %1145 = vmatmul.f32.gmra.mxu0 %v1144
        %v1146 = vpop.f32.mrf.mxu0
        %v1147 = vadd.f32 0.0, %v1146
        %1148 = vdwg.mxu0
        %1149 = vmatpush.msra.mxu0 0.0
        %1150 = vmatpush.msra.mxu0 0.0
        %1151 = vmatpush.msra.mxu0 0.0
        %1152 = vmatpush.msra.mxu0 0.0
        %1153 = vmatpush.msra.mxu0 0.0
        %1154 = vmatpush.msra.mxu0 0.0
        %1155 = vmatpush.msra.mxu0 0.0
        %1156 = vmatpush.msra.mxu0 0.0
        %1157 = vmatpush.msra.mxu0 0.0
        %1158 = vmatpush.msra.mxu0 0.0
        %1159 = vmatpush.msra.mxu0 0.0
        %1160 = vmatpush.msra.mxu0 0.0
        %1161 = vmatpush.msra.mxu0 0.0
        %1162 = vmatpush.msra.mxu0 0.0
        %1163 = vmatpush.msra.mxu0 0.0
        %v1164 = vand.u32 %v1121, 4294901760
        %v1165 = vsub.f32 %v1121, %v1164
        %v1166 = vand.u32 %v1165, 4294901760
        %v1167 = vsub.f32 %v1165, %v1166
        %v1168 = vand.u32 %v1167, 4294901760
        %1169 = vmatpush.msra.mxu0 %v1168
        %v1170 = vand.u32 %v1118, 4294901760
        %1171 = vmatmul.f32.gmra.mxu0 %v1170
        %v1172 = vpop.f32.mrf.mxu0
        %v1173 = vadd.f32 %v1147, %v1172
        %1174 = vdwg.mxu0
        %1175 = vmatpush.msra.mxu0 0.0
        %1176 = vmatpush.msra.mxu0 0.0
        %1177 = vmatpush.msra.mxu0 0.0
        %1178 = vmatpush.msra.mxu0 0.0
        %1179 = vmatpush.msra.mxu0 0.0
        %1180 = vmatpush.msra.mxu0 0.0
        %1181 = vmatpush.msra.mxu0 0.0
        %1182 = vmatpush.msra.mxu0 0.0
        %1183 = vmatpush.msra.mxu0 0.0
        %1184 = vmatpush.msra.mxu0 0.0
        %1185 = vmatpush.msra.mxu0 0.0
        %1186 = vmatpush.msra.mxu0 0.0
        %1187 = vmatpush.msra.mxu0 0.0
        %1188 = vmatpush.msra.mxu0 0.0
        %1189 = vmatpush.msra.mxu0 0.0
        %v1190 = vand.u32 %v1121, 4294901760
        %v1191 = vsub.f32 %v1121, %v1190
        %1192 = vmatpush.msra.mxu0 %v1191
        %v1193 = vand.u32 %v1118, 4294901760
        %v1194 = vsub.f32 %v1118, %v1193
        %1195 = vmatmul.f32.gmra.mxu0 %v1194
        %v1196 = vpop.f32.mrf.mxu0
        %v1197 = vadd.f32 %v1173, %v1196
        %1198 = vdwg.mxu0
        %1199 = vmatpush.msra.mxu0 0.0
        %1200 = vmatpush.msra.mxu0 0.0
        %1201 = vmatpush.msra.mxu0 0.0
        %1202 = vmatpush.msra.mxu0 0.0
        %1203 = vmatpush.msra.mxu0 0.0
        %1204 = vmatpush.msra.mxu0 0.0
        %1205 = vmatpush.msra.mxu0 0.0
        %1206 = vmatpush.msra.mxu0 0.0
        %1207 = vmatpush.msra.mxu0 0.0
        %1208 = vmatpush.msra.mxu0 0.0
        %1209 = vmatpush.msra.mxu0 0.0
        %1210 = vmatpush.msra.mxu0 0.0
        %1211 = vmatpush.msra.mxu0 0.0
        %1212 = vmatpush.msra.mxu0 0.0
        %1213 = vmatpush.msra.mxu0 0.0
        %v1214 = vand.u32 %v1121, 4294901760
        %1215 = vmatpush.msra.mxu0 %v1214
        %v1216 = vand.u32 %v1118, 4294901760
        %v1217 = vsub.f32 %v1118, %v1216
        %v1218 = vand.u32 %v1217, 4294901760
        %1219 = vmatmul.f32.gmra.mxu0 %v1218
        %v1220 = vpop.f32.mrf.mxu0
        %v1221 = vadd.f32 %v1197, %v1220
        %1222 = vdwg.mxu0
        %1223 = vmatpush.msra.mxu0 0.0
        %1224 = vmatpush.msra.mxu0 0.0
        %1225 = vmatpush.msra.mxu0 0.0
        %1226 = vmatpush.msra.mxu0 0.0
        %1227 = vmatpush.msra.mxu0 0.0
        %1228 = vmatpush.msra.mxu0 0.0
        %1229 = vmatpush.msra.mxu0 0.0
        %1230 = vmatpush.msra.mxu0 0.0
        %1231 = vmatpush.msra.mxu0 0.0
        %1232 = vmatpush.msra.mxu0 0.0
        %1233 = vmatpush.msra.mxu0 0.0
        %1234 = vmatpush.msra.mxu0 0.0
        %1235 = vmatpush.msra.mxu0 0.0
        %1236 = vmatpush.msra.mxu0 0.0
        %1237 = vmatpush.msra.mxu0 0.0
        %v1238 = vand.u32 %v1121, 4294901760
        %v1239 = vsub.f32 %v1121, %v1238
        %v1240 = vand.u32 %v1239, 4294901760
        %1241 = vmatpush.msra.mxu0 %v1240
        %v1242 = vand.u32 %v1118, 4294901760
        %1243 = vmatmul.f32.gmra.mxu0 %v1242
        %v1244 = vpop.f32.mrf.mxu0
        %v1245 = vadd.f32 %v1221, %v1244
        %1246 = vdwg.mxu0
        %1247 = vmatpush.msra.mxu0 0.0
        %1248 = vmatpush.msra.mxu0 0.0
        %1249 = vmatpush.msra.mxu0 0.0
        %1250 = vmatpush.msra.mxu0 0.0
        %1251 = vmatpush.msra.mxu0 0.0
        %1252 = vmatpush.msra.mxu0 0.0
        %1253 = vmatpush.msra.mxu0 0.0
        %1254 = vmatpush.msra.mxu0 0.0
        %1255 = vmatpush.msra.mxu0 0.0
        %1256 = vmatpush.msra.mxu0 0.0
        %1257 = vmatpush.msra.mxu0 0.0
        %1258 = vmatpush.msra.mxu0 0.0
        %1259 = vmatpush.msra.mxu0 0.0
        %1260 = vmatpush.msra.mxu0 0.0
        %1261 = vmatpush.msra.mxu0 0.0
        %v1262 = vand.u32 %v1121, 4294901760
        %1263 = vmatpush.msra.mxu0 %v1262
        %v1264 = vand.u32 %v1118, 4294901760
        %1265 = vmatmul.f32.gmra.mxu0 %v1264
        %v1266 = vpop.f32.mrf.mxu0
        %v1267 = vadd.f32 %v1245, %v1266
        %1268 = vdwg.mxu0
        %v1269 = vadd.f32 %v1114, %v1267
        %s1270 = scalar_lea.vmem %s0, 64
        %v1271 = vld [vmem:[%s1270] sm:$0xff]
        %v1273 = vsel %vm491, %v1271, 0
        %v1276 = vsel %vm495, %v469, 0
        %1278 = vmatpush.msra.mxu0 0.0
        %1279 = vmatpush.msra.mxu0 0.0
        %1280 = vmatpush.msra.mxu0 0.0
        %1281 = vmatpush.msra.mxu0 0.0
        %1282 = vmatpush.msra.mxu0 0.0
        %1283 = vmatpush.msra.mxu0 0.0
        %1284 = vmatpush.msra.mxu0 0.0
        %1285 = vmatpush.msra.mxu0 0.0
        %1286 = vmatpush.msra.mxu0 0.0
        %1287 = vmatpush.msra.mxu0 0.0
        %1288 = vmatpush.msra.mxu0 0.0
        %1289 = vmatpush.msra.mxu0 0.0
        %1290 = vmatpush.msra.mxu0 0.0
        %1291 = vmatpush.msra.mxu0 0.0
        %1292 = vmatpush.msra.mxu0 0.0
        %v1293 = vand.u32 %v1276, 4294901760
        %1294 = vmatpush.msra.mxu0 %v1293
        %v1295 = vand.u32 %v1273, 4294901760
        %v1296 = vsub.f32 %v1273, %v1295
        %v1297 = vand.u32 %v1296, 4294901760
        %v1298 = vsub.f32 %v1296, %v1297
        %v1299 = vand.u32 %v1298, 4294901760
        %1300 = vmatmul.f32.gmra.mxu0 %v1299
        %v1301 = vpop.f32.mrf.mxu0
        %v1302 = vadd.f32 0.0, %v1301
        %1303 = vdwg.mxu0
        %1304 = vmatpush.msra.mxu0 0.0
        %1305 = vmatpush.msra.mxu0 0.0
        %1306 = vmatpush.msra.mxu0 0.0
        %1307 = vmatpush.msra.mxu0 0.0
        %1308 = vmatpush.msra.mxu0 0.0
        %1309 = vmatpush.msra.mxu0 0.0
        %1310 = vmatpush.msra.mxu0 0.0
        %1311 = vmatpush.msra.mxu0 0.0
        %1312 = vmatpush.msra.mxu0 0.0
        %1313 = vmatpush.msra.mxu0 0.0
        %1314 = vmatpush.msra.mxu0 0.0
        %1315 = vmatpush.msra.mxu0 0.0
        %1316 = vmatpush.msra.mxu0 0.0
        %1317 = vmatpush.msra.mxu0 0.0
        %1318 = vmatpush.msra.mxu0 0.0
        %v1319 = vand.u32 %v1276, 4294901760
        %v1320 = vsub.f32 %v1276, %v1319
        %v1321 = vand.u32 %v1320, 4294901760
        %v1322 = vsub.f32 %v1320, %v1321
        %v1323 = vand.u32 %v1322, 4294901760
        %1324 = vmatpush.msra.mxu0 %v1323
        %v1325 = vand.u32 %v1273, 4294901760
        %1326 = vmatmul.f32.gmra.mxu0 %v1325
        %v1327 = vpop.f32.mrf.mxu0
        %v1328 = vadd.f32 %v1302, %v1327
        %1329 = vdwg.mxu0
        %1330 = vmatpush.msra.mxu0 0.0
        %1331 = vmatpush.msra.mxu0 0.0
        %1332 = vmatpush.msra.mxu0 0.0
        %1333 = vmatpush.msra.mxu0 0.0
        %1334 = vmatpush.msra.mxu0 0.0
        %1335 = vmatpush.msra.mxu0 0.0
        %1336 = vmatpush.msra.mxu0 0.0
        %1337 = vmatpush.msra.mxu0 0.0
        %1338 = vmatpush.msra.mxu0 0.0
        %1339 = vmatpush.msra.mxu0 0.0
        %1340 = vmatpush.msra.mxu0 0.0
        %1341 = vmatpush.msra.mxu0 0.0
        %1342 = vmatpush.msra.mxu0 0.0
        %1343 = vmatpush.msra.mxu0 0.0
        %1344 = vmatpush.msra.mxu0 0.0
        %v1345 = vand.u32 %v1276, 4294901760
        %v1346 = vsub.f32 %v1276, %v1345
        %1347 = vmatpush.msra.mxu0 %v1346
        %v1348 = vand.u32 %v1273, 4294901760
        %v1349 = vsub.f32 %v1273, %v1348
        %1350 = vmatmul.f32.gmra.mxu0 %v1349
        %v1351 = vpop.f32.mrf.mxu0
        %v1352 = vadd.f32 %v1328, %v1351
        %1353 = vdwg.mxu0
        %1354 = vmatpush.msra.mxu0 0.0
        %1355 = vmatpush.msra.mxu0 0.0
        %1356 = vmatpush.msra.mxu0 0.0
        %1357 = vmatpush.msra.mxu0 0.0
        %1358 = vmatpush.msra.mxu0 0.0
        %1359 = vmatpush.msra.mxu0 0.0
        %1360 = vmatpush.msra.mxu0 0.0
        %1361 = vmatpush.msra.mxu0 0.0
        %1362 = vmatpush.msra.mxu0 0.0
        %1363 = vmatpush.msra.mxu0 0.0
        %1364 = vmatpush.msra.mxu0 0.0
        %1365 = vmatpush.msra.mxu0 0.0
        %1366 = vmatpush.msra.mxu0 0.0
        %1367 = vmatpush.msra.mxu0 0.0
        %1368 = vmatpush.msra.mxu0 0.0
        %v1369 = vand.u32 %v1276, 4294901760
        %1370 = vmatpush.msra.mxu0 %v1369
        %v1371 = vand.u32 %v1273, 4294901760
        %v1372 = vsub.f32 %v1273, %v1371
        %v1373 = vand.u32 %v1372, 4294901760
        %1374 = vmatmul.f32.gmra.mxu0 %v1373
        %v1375 = vpop.f32.mrf.mxu0
        %v1376 = vadd.f32 %v1352, %v1375
        %1377 = vdwg.mxu0
        %1378 = vmatpush.msra.mxu0 0.0
        %1379 = vmatpush.msra.mxu0 0.0
        %1380 = vmatpush.msra.mxu0 0.0
        %1381 = vmatpush.msra.mxu0 0.0
        %1382 = vmatpush.msra.mxu0 0.0
        %1383 = vmatpush.msra.mxu0 0.0
        %1384 = vmatpush.msra.mxu0 0.0
        %1385 = vmatpush.msra.mxu0 0.0
        %1386 = vmatpush.msra.mxu0 0.0
        %1387 = vmatpush.msra.mxu0 0.0
        %1388 = vmatpush.msra.mxu0 0.0
        %1389 = vmatpush.msra.mxu0 0.0
        %1390 = vmatpush.msra.mxu0 0.0
        %1391 = vmatpush.msra.mxu0 0.0
        %1392 = vmatpush.msra.mxu0 0.0
        %v1393 = vand.u32 %v1276, 4294901760
        %v1394 = vsub.f32 %v1276, %v1393
        %v1395 = vand.u32 %v1394, 4294901760
        %1396 = vmatpush.msra.mxu0 %v1395
        %v1397 = vand.u32 %v1273, 4294901760
        %1398 = vmatmul.f32.gmra.mxu0 %v1397
        %v1399 = vpop.f32.mrf.mxu0
        %v1400 = vadd.f32 %v1376, %v1399
        %1401 = vdwg.mxu0
        %1402 = vmatpush.msra.mxu0 0.0
        %1403 = vmatpush.msra.mxu0 0.0
        %1404 = vmatpush.msra.mxu0 0.0
        %1405 = vmatpush.msra.mxu0 0.0
        %1406 = vmatpush.msra.mxu0 0.0
        %1407 = vmatpush.msra.mxu0 0.0
        %1408 = vmatpush.msra.mxu0 0.0
        %1409 = vmatpush.msra.mxu0 0.0
        %1410 = vmatpush.msra.mxu0 0.0
        %1411 = vmatpush.msra.mxu0 0.0
        %1412 = vmatpush.msra.mxu0 0.0
        %1413 = vmatpush.msra.mxu0 0.0
        %1414 = vmatpush.msra.mxu0 0.0
        %1415 = vmatpush.msra.mxu0 0.0
        %1416 = vmatpush.msra.mxu0 0.0
        %v1417 = vand.u32 %v1276, 4294901760
        %1418 = vmatpush.msra.mxu0 %v1417
        %v1419 = vand.u32 %v1273, 4294901760
        %1420 = vmatmul.f32.gmra.mxu0 %v1419
        %v1421 = vpop.f32.mrf.mxu0
        %v1422 = vadd.f32 %v1400, %v1421
        %1423 = vdwg.mxu0
        %v1424 = vadd.f32 %v1269, %v1422
        %1425 = vrot.lane.b32.xlu0 %v469, 1
        %v1426 = vpop.permute.xlu0 %1425
        %v1428 = vsel %vm800, 0.0, %v1426
        %v1429 = vsel %vm803, %v1428, 0.0
        %s1430 = scalar_lea.vmem %s0, 48
        %v1431 = vld [vmem:[%s1430] sm:$0xff]
        %v1433 = vsel %vm491, %v1431, 0
        %v1436 = vsel %vm495, %v1429, 0
        %1438 = vmatpush.msra.mxu0 0.0
        %1439 = vmatpush.msra.mxu0 0.0
        %1440 = vmatpush.msra.mxu0 0.0
        %1441 = vmatpush.msra.mxu0 0.0
        %1442 = vmatpush.msra.mxu0 0.0
        %1443 = vmatpush.msra.mxu0 0.0
        %1444 = vmatpush.msra.mxu0 0.0
        %1445 = vmatpush.msra.mxu0 0.0
        %1446 = vmatpush.msra.mxu0 0.0
        %1447 = vmatpush.msra.mxu0 0.0
        %1448 = vmatpush.msra.mxu0 0.0
        %1449 = vmatpush.msra.mxu0 0.0
        %1450 = vmatpush.msra.mxu0 0.0
        %1451 = vmatpush.msra.mxu0 0.0
        %1452 = vmatpush.msra.mxu0 0.0
        %v1453 = vand.u32 %v1436, 4294901760
        %1454 = vmatpush.msra.mxu0 %v1453
        %v1455 = vand.u32 %v1433, 4294901760
        %v1456 = vsub.f32 %v1433, %v1455
        %v1457 = vand.u32 %v1456, 4294901760
        %v1458 = vsub.f32 %v1456, %v1457
        %v1459 = vand.u32 %v1458, 4294901760
        %1460 = vmatmul.f32.gmra.mxu0 %v1459
        %v1461 = vpop.f32.mrf.mxu0
        %v1462 = vadd.f32 0.0, %v1461
        %1463 = vdwg.mxu0
        %1464 = vmatpush.msra.mxu0 0.0
        %1465 = vmatpush.msra.mxu0 0.0
        %1466 = vmatpush.msra.mxu0 0.0
        %1467 = vmatpush.msra.mxu0 0.0
        %1468 = vmatpush.msra.mxu0 0.0
        %1469 = vmatpush.msra.mxu0 0.0
        %1470 = vmatpush.msra.mxu0 0.0
        %1471 = vmatpush.msra.mxu0 0.0
        %1472 = vmatpush.msra.mxu0 0.0
        %1473 = vmatpush.msra.mxu0 0.0
        %1474 = vmatpush.msra.mxu0 0.0
        %1475 = vmatpush.msra.mxu0 0.0
        %1476 = vmatpush.msra.mxu0 0.0
        %1477 = vmatpush.msra.mxu0 0.0
        %1478 = vmatpush.msra.mxu0 0.0
        %v1479 = vand.u32 %v1436, 4294901760
        %v1480 = vsub.f32 %v1436, %v1479
        %v1481 = vand.u32 %v1480, 4294901760
        %v1482 = vsub.f32 %v1480, %v1481
        %v1483 = vand.u32 %v1482, 4294901760
        %1484 = vmatpush.msra.mxu0 %v1483
        %v1485 = vand.u32 %v1433, 4294901760
        %1486 = vmatmul.f32.gmra.mxu0 %v1485
        %v1487 = vpop.f32.mrf.mxu0
        %v1488 = vadd.f32 %v1462, %v1487
        %1489 = vdwg.mxu0
        %1490 = vmatpush.msra.mxu0 0.0
        %1491 = vmatpush.msra.mxu0 0.0
        %1492 = vmatpush.msra.mxu0 0.0
        %1493 = vmatpush.msra.mxu0 0.0
        %1494 = vmatpush.msra.mxu0 0.0
        %1495 = vmatpush.msra.mxu0 0.0
        %1496 = vmatpush.msra.mxu0 0.0
        %1497 = vmatpush.msra.mxu0 0.0
        %1498 = vmatpush.msra.mxu0 0.0
        %1499 = vmatpush.msra.mxu0 0.0
        %1500 = vmatpush.msra.mxu0 0.0
        %1501 = vmatpush.msra.mxu0 0.0
        %1502 = vmatpush.msra.mxu0 0.0
        %1503 = vmatpush.msra.mxu0 0.0
        %1504 = vmatpush.msra.mxu0 0.0
        %v1505 = vand.u32 %v1436, 4294901760
        %v1506 = vsub.f32 %v1436, %v1505
        %1507 = vmatpush.msra.mxu0 %v1506
        %v1508 = vand.u32 %v1433, 4294901760
        %v1509 = vsub.f32 %v1433, %v1508
        %1510 = vmatmul.f32.gmra.mxu0 %v1509
        %v1511 = vpop.f32.mrf.mxu0
        %v1512 = vadd.f32 %v1488, %v1511
        %1513 = vdwg.mxu0
        %1514 = vmatpush.msra.mxu0 0.0
        %1515 = vmatpush.msra.mxu0 0.0
        %1516 = vmatpush.msra.mxu0 0.0
        %1517 = vmatpush.msra.mxu0 0.0
        %1518 = vmatpush.msra.mxu0 0.0
        %1519 = vmatpush.msra.mxu0 0.0
        %1520 = vmatpush.msra.mxu0 0.0
        %1521 = vmatpush.msra.mxu0 0.0
        %1522 = vmatpush.msra.mxu0 0.0
        %1523 = vmatpush.msra.mxu0 0.0
        %1524 = vmatpush.msra.mxu0 0.0
        %1525 = vmatpush.msra.mxu0 0.0
        %1526 = vmatpush.msra.mxu0 0.0
        %1527 = vmatpush.msra.mxu0 0.0
        %1528 = vmatpush.msra.mxu0 0.0
        %v1529 = vand.u32 %v1436, 4294901760
        %1530 = vmatpush.msra.mxu0 %v1529
        %v1531 = vand.u32 %v1433, 4294901760
        %v1532 = vsub.f32 %v1433, %v1531
        %v1533 = vand.u32 %v1532, 4294901760
        %1534 = vmatmul.f32.gmra.mxu0 %v1533
        %v1535 = vpop.f32.mrf.mxu0
        %v1536 = vadd.f32 %v1512, %v1535
        %1537 = vdwg.mxu0
        %1538 = vmatpush.msra.mxu0 0.0
        %1539 = vmatpush.msra.mxu0 0.0
        %1540 = vmatpush.msra.mxu0 0.0
        %1541 = vmatpush.msra.mxu0 0.0
        %1542 = vmatpush.msra.mxu0 0.0
        %1543 = vmatpush.msra.mxu0 0.0
        %1544 = vmatpush.msra.mxu0 0.0
        %1545 = vmatpush.msra.mxu0 0.0
        %1546 = vmatpush.msra.mxu0 0.0
        %1547 = vmatpush.msra.mxu0 0.0
        %1548 = vmatpush.msra.mxu0 0.0
        %1549 = vmatpush.msra.mxu0 0.0
        %1550 = vmatpush.msra.mxu0 0.0
        %1551 = vmatpush.msra.mxu0 0.0
        %1552 = vmatpush.msra.mxu0 0.0
        %v1553 = vand.u32 %v1436, 4294901760
        %v1554 = vsub.f32 %v1436, %v1553
        %v1555 = vand.u32 %v1554, 4294901760
        %1556 = vmatpush.msra.mxu0 %v1555
        %v1557 = vand.u32 %v1433, 4294901760
        %1558 = vmatmul.f32.gmra.mxu0 %v1557
        %v1559 = vpop.f32.mrf.mxu0
        %v1560 = vadd.f32 %v1536, %v1559
        %1561 = vdwg.mxu0
        %1562 = vmatpush.msra.mxu0 0.0
        %1563 = vmatpush.msra.mxu0 0.0
        %1564 = vmatpush.msra.mxu0 0.0
        %1565 = vmatpush.msra.mxu0 0.0
        %1566 = vmatpush.msra.mxu0 0.0
        %1567 = vmatpush.msra.mxu0 0.0
        %1568 = vmatpush.msra.mxu0 0.0
        %1569 = vmatpush.msra.mxu0 0.0
        %1570 = vmatpush.msra.mxu0 0.0
        %1571 = vmatpush.msra.mxu0 0.0
        %1572 = vmatpush.msra.mxu0 0.0
        %1573 = vmatpush.msra.mxu0 0.0
        %1574 = vmatpush.msra.mxu0 0.0
        %1575 = vmatpush.msra.mxu0 0.0
        %1576 = vmatpush.msra.mxu0 0.0
        %v1577 = vand.u32 %v1436, 4294901760
        %1578 = vmatpush.msra.mxu0 %v1577
        %v1579 = vand.u32 %v1433, 4294901760
        %1580 = vmatmul.f32.gmra.mxu0 %v1579
        %v1581 = vpop.f32.mrf.mxu0
        %v1582 = vadd.f32 %v1560, %v1581
        %1583 = vdwg.mxu0
        %v1584 = vadd.f32 %v1424, %v1582
        %s1585 = scalar_lea.vmem %s0, 16
        %v1586 = vld [vmem:[%s1585] sm:$0xff]
        %v1588 = vsel %vm491, %v1586, 0
        %v1591 = vsel %vm495, %v471, 0
        %1593 = vmatpush.msra.mxu0 0.0
        %1594 = vmatpush.msra.mxu0 0.0
        %1595 = vmatpush.msra.mxu0 0.0
        %1596 = vmatpush.msra.mxu0 0.0
        %1597 = vmatpush.msra.mxu0 0.0
        %1598 = vmatpush.msra.mxu0 0.0
        %1599 = vmatpush.msra.mxu0 0.0
        %1600 = vmatpush.msra.mxu0 0.0
        %1601 = vmatpush.msra.mxu0 0.0
        %1602 = vmatpush.msra.mxu0 0.0
        %1603 = vmatpush.msra.mxu0 0.0
        %1604 = vmatpush.msra.mxu0 0.0
        %1605 = vmatpush.msra.mxu0 0.0
        %1606 = vmatpush.msra.mxu0 0.0
        %1607 = vmatpush.msra.mxu0 0.0
        %v1608 = vand.u32 %v1591, 4294901760
        %1609 = vmatpush.msra.mxu0 %v1608
        %v1610 = vand.u32 %v1588, 4294901760
        %v1611 = vsub.f32 %v1588, %v1610
        %v1612 = vand.u32 %v1611, 4294901760
        %v1613 = vsub.f32 %v1611, %v1612
        %v1614 = vand.u32 %v1613, 4294901760
        %1615 = vmatmul.f32.gmra.mxu0 %v1614
        %v1616 = vpop.f32.mrf.mxu0
        %v1617 = vadd.f32 0.0, %v1616
        %1618 = vdwg.mxu0
        %1619 = vmatpush.msra.mxu0 0.0
        %1620 = vmatpush.msra.mxu0 0.0
        %1621 = vmatpush.msra.mxu0 0.0
        %1622 = vmatpush.msra.mxu0 0.0
        %1623 = vmatpush.msra.mxu0 0.0
        %1624 = vmatpush.msra.mxu0 0.0
        %1625 = vmatpush.msra.mxu0 0.0
        %1626 = vmatpush.msra.mxu0 0.0
        %1627 = vmatpush.msra.mxu0 0.0
        %1628 = vmatpush.msra.mxu0 0.0
        %1629 = vmatpush.msra.mxu0 0.0
        %1630 = vmatpush.msra.mxu0 0.0
        %1631 = vmatpush.msra.mxu0 0.0
        %1632 = vmatpush.msra.mxu0 0.0
        %1633 = vmatpush.msra.mxu0 0.0
        %v1634 = vand.u32 %v1591, 4294901760
        %v1635 = vsub.f32 %v1591, %v1634
        %v1636 = vand.u32 %v1635, 4294901760
        %v1637 = vsub.f32 %v1635, %v1636
        %v1638 = vand.u32 %v1637, 4294901760
        %1639 = vmatpush.msra.mxu0 %v1638
        %v1640 = vand.u32 %v1588, 4294901760
        %1641 = vmatmul.f32.gmra.mxu0 %v1640
        %v1642 = vpop.f32.mrf.mxu0
        %v1643 = vadd.f32 %v1617, %v1642
        %1644 = vdwg.mxu0
        %1645 = vmatpush.msra.mxu0 0.0
        %1646 = vmatpush.msra.mxu0 0.0
        %1647 = vmatpush.msra.mxu0 0.0
        %1648 = vmatpush.msra.mxu0 0.0
        %1649 = vmatpush.msra.mxu0 0.0
        %1650 = vmatpush.msra.mxu0 0.0
        %1651 = vmatpush.msra.mxu0 0.0
        %1652 = vmatpush.msra.mxu0 0.0
        %1653 = vmatpush.msra.mxu0 0.0
        %1654 = vmatpush.msra.mxu0 0.0
        %1655 = vmatpush.msra.mxu0 0.0
        %1656 = vmatpush.msra.mxu0 0.0
        %1657 = vmatpush.msra.mxu0 0.0
        %1658 = vmatpush.msra.mxu0 0.0
        %1659 = vmatpush.msra.mxu0 0.0
        %v1660 = vand.u32 %v1591, 4294901760
        %v1661 = vsub.f32 %v1591, %v1660
        %1662 = vmatpush.msra.mxu0 %v1661
        %v1663 = vand.u32 %v1588, 4294901760
        %v1664 = vsub.f32 %v1588, %v1663
        %1665 = vmatmul.f32.gmra.mxu0 %v1664
        %v1666 = vpop.f32.mrf.mxu0
        %v1667 = vadd.f32 %v1643, %v1666
        %1668 = vdwg.mxu0
        %1669 = vmatpush.msra.mxu0 0.0
        %1670 = vmatpush.msra.mxu0 0.0
        %1671 = vmatpush.msra.mxu0 0.0
        %1672 = vmatpush.msra.mxu0 0.0
        %1673 = vmatpush.msra.mxu0 0.0
        %1674 = vmatpush.msra.mxu0 0.0
        %1675 = vmatpush.msra.mxu0 0.0
        %1676 = vmatpush.msra.mxu0 0.0
        %1677 = vmatpush.msra.mxu0 0.0
        %1678 = vmatpush.msra.mxu0 0.0
        %1679 = vmatpush.msra.mxu0 0.0
        %1680 = vmatpush.msra.mxu0 0.0
        %1681 = vmatpush.msra.mxu0 0.0
        %1682 = vmatpush.msra.mxu0 0.0
        %1683 = vmatpush.msra.mxu0 0.0
        %v1684 = vand.u32 %v1591, 4294901760
        %1685 = vmatpush.msra.mxu0 %v1684
        %v1686 = vand.u32 %v1588, 4294901760
        %v1687 = vsub.f32 %v1588, %v1686
        %v1688 = vand.u32 %v1687, 4294901760
        %1689 = vmatmul.f32.gmra.mxu0 %v1688
        %v1690 = vpop.f32.mrf.mxu0
        %v1691 = vadd.f32 %v1667, %v1690
        %1692 = vdwg.mxu0
        %1693 = vmatpush.msra.mxu0 0.0
        %1694 = vmatpush.msra.mxu0 0.0
        %1695 = vmatpush.msra.mxu0 0.0
        %1696 = vmatpush.msra.mxu0 0.0
        %1697 = vmatpush.msra.mxu0 0.0
        %1698 = vmatpush.msra.mxu0 0.0
        %1699 = vmatpush.msra.mxu0 0.0
        %1700 = vmatpush.msra.mxu0 0.0
        %1701 = vmatpush.msra.mxu0 0.0
        %1702 = vmatpush.msra.mxu0 0.0
        %1703 = vmatpush.msra.mxu0 0.0
        %1704 = vmatpush.msra.mxu0 0.0
        %1705 = vmatpush.msra.mxu0 0.0
        %1706 = vmatpush.msra.mxu0 0.0
        %1707 = vmatpush.msra.mxu0 0.0
        %v1708 = vand.u32 %v1591, 4294901760
        %v1709 = vsub.f32 %v1591, %v1708
        %v1710 = vand.u32 %v1709, 4294901760
        %1711 = vmatpush.msra.mxu0 %v1710
        %v1712 = vand.u32 %v1588, 4294901760
        %1713 = vmatmul.f32.gmra.mxu0 %v1712
        %v1714 = vpop.f32.mrf.mxu0
        %v1715 = vadd.f32 %v1691, %v1714
        %1716 = vdwg.mxu0
        %1717 = vmatpush.msra.mxu0 0.0
        %1718 = vmatpush.msra.mxu0 0.0
        %1719 = vmatpush.msra.mxu0 0.0
        %1720 = vmatpush.msra.mxu0 0.0
        %1721 = vmatpush.msra.mxu0 0.0
        %1722 = vmatpush.msra.mxu0 0.0
        %1723 = vmatpush.msra.mxu0 0.0
        %1724 = vmatpush.msra.mxu0 0.0
        %1725 = vmatpush.msra.mxu0 0.0
        %1726 = vmatpush.msra.mxu0 0.0
        %1727 = vmatpush.msra.mxu0 0.0
        %1728 = vmatpush.msra.mxu0 0.0
        %1729 = vmatpush.msra.mxu0 0.0
        %1730 = vmatpush.msra.mxu0 0.0
        %1731 = vmatpush.msra.mxu0 0.0
        %v1732 = vand.u32 %v1591, 4294901760
        %1733 = vmatpush.msra.mxu0 %v1732
        %v1734 = vand.u32 %v1588, 4294901760
        %1735 = vmatmul.f32.gmra.mxu0 %v1734
        %v1736 = vpop.f32.mrf.mxu0
        %v1737 = vadd.f32 %v1715, %v1736
        %1738 = vdwg.mxu0
        %v1739 = vadd.f32 %v1584, %v1737
        %1740 = vrot.lane.b32.xlu0 %v471, 1
        %v1741 = vpop.permute.xlu0 %1740
        %v1743 = vsel %vm800, 0.0, %v1741
        %v1744 = vsel %vm803, %v1743, 0.0
        %v1745 = vld [vmem:[%s0] sm:$0xff]
        %v1747 = vsel %vm491, %v1745, 0
        %v1750 = vsel %vm495, %v1744, 0
        %1752 = vmatpush.msra.mxu0 0.0
        %1753 = vmatpush.msra.mxu0 0.0
        %1754 = vmatpush.msra.mxu0 0.0
        %1755 = vmatpush.msra.mxu0 0.0
        %1756 = vmatpush.msra.mxu0 0.0
        %1757 = vmatpush.msra.mxu0 0.0
        %1758 = vmatpush.msra.mxu0 0.0
        %1759 = vmatpush.msra.mxu0 0.0
        %1760 = vmatpush.msra.mxu0 0.0
        %1761 = vmatpush.msra.mxu0 0.0
        %1762 = vmatpush.msra.mxu0 0.0
        %1763 = vmatpush.msra.mxu0 0.0
        %1764 = vmatpush.msra.mxu0 0.0
        %1765 = vmatpush.msra.mxu0 0.0
        %1766 = vmatpush.msra.mxu0 0.0
        %v1767 = vand.u32 %v1750, 4294901760
        %1768 = vmatpush.msra.mxu0 %v1767
        %v1769 = vand.u32 %v1747, 4294901760
        %v1770 = vsub.f32 %v1747, %v1769
        %v1771 = vand.u32 %v1770, 4294901760
        %v1772 = vsub.f32 %v1770, %v1771
        %v1773 = vand.u32 %v1772, 4294901760
        %1774 = vmatmul.f32.gmra.mxu0 %v1773
        %v1775 = vpop.f32.mrf.mxu0
        %v1776 = vadd.f32 0.0, %v1775
        %1777 = vdwg.mxu0
        %1778 = vmatpush.msra.mxu0 0.0
        %1779 = vmatpush.msra.mxu0 0.0
        %1780 = vmatpush.msra.mxu0 0.0
        %1781 = vmatpush.msra.mxu0 0.0
        %1782 = vmatpush.msra.mxu0 0.0
        %1783 = vmatpush.msra.mxu0 0.0
        %1784 = vmatpush.msra.mxu0 0.0
        %1785 = vmatpush.msra.mxu0 0.0
        %1786 = vmatpush.msra.mxu0 0.0
        %1787 = vmatpush.msra.mxu0 0.0
        %1788 = vmatpush.msra.mxu0 0.0
        %1789 = vmatpush.msra.mxu0 0.0
        %1790 = vmatpush.msra.mxu0 0.0
        %1791 = vmatpush.msra.mxu0 0.0
        %1792 = vmatpush.msra.mxu0 0.0
        %v1793 = vand.u32 %v1750, 4294901760
        %v1794 = vsub.f32 %v1750, %v1793
        %v1795 = vand.u32 %v1794, 4294901760
        %v1796 = vsub.f32 %v1794, %v1795
        %v1797 = vand.u32 %v1796, 4294901760
        %1798 = vmatpush.msra.mxu0 %v1797
        %v1799 = vand.u32 %v1747, 4294901760
        %1800 = vmatmul.f32.gmra.mxu0 %v1799
        %v1801 = vpop.f32.mrf.mxu0
        %v1802 = vadd.f32 %v1776, %v1801
        %1803 = vdwg.mxu0
        %1804 = vmatpush.msra.mxu0 0.0
        %1805 = vmatpush.msra.mxu0 0.0
        %1806 = vmatpush.msra.mxu0 0.0
        %1807 = vmatpush.msra.mxu0 0.0
        %1808 = vmatpush.msra.mxu0 0.0
        %1809 = vmatpush.msra.mxu0 0.0
        %1810 = vmatpush.msra.mxu0 0.0
        %1811 = vmatpush.msra.mxu0 0.0
        %1812 = vmatpush.msra.mxu0 0.0
        %1813 = vmatpush.msra.mxu0 0.0
        %1814 = vmatpush.msra.mxu0 0.0
        %1815 = vmatpush.msra.mxu0 0.0
        %1816 = vmatpush.msra.mxu0 0.0
        %1817 = vmatpush.msra.mxu0 0.0
        %1818 = vmatpush.msra.mxu0 0.0
        %v1819 = vand.u32 %v1750, 4294901760
        %v1820 = vsub.f32 %v1750, %v1819
        %1821 = vmatpush.msra.mxu0 %v1820
        %v1822 = vand.u32 %v1747, 4294901760
        %v1823 = vsub.f32 %v1747, %v1822
        %1824 = vmatmul.f32.gmra.mxu0 %v1823
        %v1825 = vpop.f32.mrf.mxu0
        %v1826 = vadd.f32 %v1802, %v1825
        %1827 = vdwg.mxu0
        %1828 = vmatpush.msra.mxu0 0.0
        %1829 = vmatpush.msra.mxu0 0.0
        %1830 = vmatpush.msra.mxu0 0.0
        %1831 = vmatpush.msra.mxu0 0.0
        %1832 = vmatpush.msra.mxu0 0.0
        %1833 = vmatpush.msra.mxu0 0.0
        %1834 = vmatpush.msra.mxu0 0.0
        %1835 = vmatpush.msra.mxu0 0.0
        %1836 = vmatpush.msra.mxu0 0.0
        %1837 = vmatpush.msra.mxu0 0.0
        %1838 = vmatpush.msra.mxu0 0.0
        %1839 = vmatpush.msra.mxu0 0.0
        %1840 = vmatpush.msra.mxu0 0.0
        %1841 = vmatpush.msra.mxu0 0.0
        %1842 = vmatpush.msra.mxu0 0.0
        %v1843 = vand.u32 %v1750, 4294901760
        %1844 = vmatpush.msra.mxu0 %v1843
        %v1845 = vand.u32 %v1747, 4294901760
        %v1846 = vsub.f32 %v1747, %v1845
        %v1847 = vand.u32 %v1846, 4294901760
        %1848 = vmatmul.f32.gmra.mxu0 %v1847
        %v1849 = vpop.f32.mrf.mxu0
        %v1850 = vadd.f32 %v1826, %v1849
        %1851 = vdwg.mxu0
        %1852 = vmatpush.msra.mxu0 0.0
        %1853 = vmatpush.msra.mxu0 0.0
        %1854 = vmatpush.msra.mxu0 0.0
        %1855 = vmatpush.msra.mxu0 0.0
        %1856 = vmatpush.msra.mxu0 0.0
        %1857 = vmatpush.msra.mxu0 0.0
        %1858 = vmatpush.msra.mxu0 0.0
        %1859 = vmatpush.msra.mxu0 0.0
        %1860 = vmatpush.msra.mxu0 0.0
        %1861 = vmatpush.msra.mxu0 0.0
        %1862 = vmatpush.msra.mxu0 0.0
        %1863 = vmatpush.msra.mxu0 0.0
        %1864 = vmatpush.msra.mxu0 0.0
        %1865 = vmatpush.msra.mxu0 0.0
        %1866 = vmatpush.msra.mxu0 0.0
        %v1867 = vand.u32 %v1750, 4294901760
        %v1868 = vsub.f32 %v1750, %v1867
        %v1869 = vand.u32 %v1868, 4294901760
        %1870 = vmatpush.msra.mxu0 %v1869
        %v1871 = vand.u32 %v1747, 4294901760
        %1872 = vmatmul.f32.gmra.mxu0 %v1871
        %v1873 = vpop.f32.mrf.mxu0
        %v1874 = vadd.f32 %v1850, %v1873
        %1875 = vdwg.mxu0
        %1876 = vmatpush.msra.mxu0 0.0
        %1877 = vmatpush.msra.mxu0 0.0
        %1878 = vmatpush.msra.mxu0 0.0
        %1879 = vmatpush.msra.mxu0 0.0
        %1880 = vmatpush.msra.mxu0 0.0
        %1881 = vmatpush.msra.mxu0 0.0
        %1882 = vmatpush.msra.mxu0 0.0
        %1883 = vmatpush.msra.mxu0 0.0
        %1884 = vmatpush.msra.mxu0 0.0
        %1885 = vmatpush.msra.mxu0 0.0
        %1886 = vmatpush.msra.mxu0 0.0
        %1887 = vmatpush.msra.mxu0 0.0
        %1888 = vmatpush.msra.mxu0 0.0
        %1889 = vmatpush.msra.mxu0 0.0
        %1890 = vmatpush.msra.mxu0 0.0
        %v1891 = vand.u32 %v1750, 4294901760
        %1892 = vmatpush.msra.mxu0 %v1891
        %v1893 = vand.u32 %v1747, 4294901760
        %1894 = vmatmul.f32.gmra.mxu0 %v1893
        %v1895 = vpop.f32.mrf.mxu0
        %v1896 = vadd.f32 %v1874, %v1895
        %1897 = vdwg.mxu0
        %v1898 = vadd.f32 %v1739, %v1896
        %v1899 = vld [vmem:[%s1] sm:$0xff]
        %1901 = vset.pattern.permute.xlu0 0
        %1902 = vperm.xlu0 %1901, %v1899
        %v1903 = vpop.permute.xlu0 %1902
        %v1905 = vadd.f32 %v1898, %v1903
        %1906 = vst [vmem:[%s423] sm:$0xff] %v1905
        %s1907 = sand.u32 %s254, 1
        %s1908 = scalar_lea.sflag [#allocation3], %s1907
        %s1909 = sand.u32 %s254, 1
        %s1910 = smul.addr %s1909, 8
        %s1911 = scalar_lea.vmem [#allocation2], %s1910
        // Predicated region
        $region53: #{tpu_custom_call.1} parent=51 // pred_check
          %p1912 = pneg %p264
        $region54: #{tpu_custom_call.1} parent=51 // pred_check_branch
          %1914 = sbr.rel (%p1912) target = $region56
        $region55: #{tpu_custom_call.1} parent=51 // pred_region
          %1916 = vsyncadd %s1908, 0
          %s1917 = sadd.s32 %s27, %s26
          %s1918 = smul.addr %s1917, 8
          %s1919 = scalar_lea.hbm %s8, %s1918
          %s1921 = sshll.u32 %s1911, 4
          %s1922 = int_to_ptr.vmem [resolvable:$true] %s1921
          %s1923 = sshll.u32 %s1919, 4
          %s1924 = int_to_ptr.hbm [resolvable:$true] %s1923
          %1926 = dma.vmem_to_hbm [thread:$0]  %s1922, 128, %s1924, %s1908
        $region56: #{tpu_custom_call.1} parent=51 // pred_fallthru
          _
      $region52: #{tpu_custom_call.1} parent=5 // pred_fallthru
        _
      %p1927 = scmp.le.s32.totalorder 2, %s17
      // Predicated region
      $region57: #{tpu_custom_call.1} parent=5 // pred_check
        %p1928 = pneg %p1927
      $region58: #{tpu_custom_call.1} parent=5 // pred_check_branch
        %1930 = sbr.rel (%p1928) target = $region60
      $region59: #{tpu_custom_call.1} parent=5 // pred_region
        %s1931 = ssub.s32 %s17, 2
        // Predicated region
        $region61: #{tpu_custom_call.1} parent=59 // pred_check
          %p1932 = pneg %p270
        $region62: #{tpu_custom_call.1} parent=59 // pred_check_branch
          %1934 = sbr.rel (%p1932) target = $region64
        $region63: #{tpu_custom_call.1} parent=59 // pred_region
          %s1935 = sand.u32 %s255, 1
          %s1936 = scalar_lea.sflag [#allocation3], %s1935
          %s1937 = sand.u32 %s255, 1
          %s1938 = smul.addr %s1937, 8
          %s1939 = scalar_lea.vmem [#allocation2], %s1938
          %1941 = dma.done %s1936, 128
        $region64: #{tpu_custom_call.1} parent=59 // pred_fallthru
          _
      $region60: #{tpu_custom_call.1} parent=5 // pred_fallthru
        _
    $region6: #{tpu_custom_call.1} parent=1 // loop_footer
      %s21 = sadd.s32 1, %s17
    $region7: #{tpu_custom_call.1} parent=1 // loop_footer_branch
      %16 = sbr.rel target = $region3
    $region8: #{tpu_custom_call.1} parent=1 // loop_exit
      _
    %1942 = vsyncpa [#allocation3], 1
    %s1943 = scalar_lea.sflag [#allocation3], 1
    %1944 = vsyncpa %s1943, 1

</llo_original>
